<compile_context>
chip_gen: v7x
topology: tpu7x:2x2x1
jax: 0.10.0
libtpu: 0.0.40
codegen_flags: <defaults>
</compile_context>

<pallas_src>
import jax
import jax.numpy as jnp
from jax.experimental import pallas as pl
from jax.experimental.pallas import tpu as pltpu

# logical sizes
D_IN = 784
D_LBL = 10
D_H = 200
# padded (lane-aligned) hidden size
HP = 256                    # 2 * 128
_EPS = 1e-5                 # nn.LayerNorm default


def discriminator_kernel(x_ref, l_ref, w1a_ref, w1b_ref, p_ref, c0_ref, o_ref):
    # x: (TB,784) f32 ; lbl: (TB,10) f32 ; w1a: (784,HP) bf16 ; w1b: (10,HP) bf16
    # p: (8,HP) f32 rows = [b1, gamma*w2, 1/200, sum(gamma*w2)/200, 0, 0, 0, 0]
    # c0: (1,1) f32 = sum(beta*w2) + b2 ; o: (1,TB) f32
    p = p_ref[...]

    # Linear(794 -> 200) as two bf16 MXU matmuls with f32 accumulation.  The bf16 cast
    # of the activations happens here (no wrapper pre-pass); weights pre-cast offline.
    x = x_ref[...].astype(jnp.bfloat16)
    lbl = l_ref[...].astype(jnp.bfloat16)
    h = jnp.dot(x, w1a_ref[...], preferred_element_type=jnp.float32)
    h = h + jnp.dot(lbl, w1b_ref[...], preferred_element_type=jnp.float32)
    h = h + p[0:1, :]                       # + b1 ; pad lanes (200..255) stay exactly 0

    # LeakyReLU(0.02).  Pad lanes remain exactly 0.
    h = jnp.where(h > 0.0, h, 0.02 * h)

    # Fused LayerNorm(200) + Linear(200 -> 1), all statistics produced directly in
    # lane-dense (1, TB) row layout by contracting the packed param matrix with h / h*h
    # on the MXU (no pad-lane mask needed: pad lanes of h and of every p row are 0).
    dims = (((1,), (1,)), ((), ()))
    red_h = jax.lax.dot_general(p, h, dims, preferred_element_type=jnp.float32)       # (8, TB)
    red_h2 = jax.lax.dot_general(p, h * h, dims, preferred_element_type=jnp.float32)  # (8, TB)
    s = red_h[1:2, :]             # sum_j h_ij * gamma_j * w2_j
    mean = red_h[2:3, :]          # sum_j h_ij / 200
    mean_sgw2 = red_h[3:4, :]     # mean_i * sum_j(gamma_j * w2_j)
    var = red_h2[2:3, :] - mean * mean
    y = jax.lax.rsqrt(var + _EPS) * (s - mean_sgw2) + c0_ref[...]

    # Exact sigmoid (no approx reciprocal) -> strictly inside [0, 1], BCE-safe.
    o_ref[...] = 1.0 / (1.0 + jnp.exp(-y))


def _pallas_discriminator(x, labels, kernel_params, tb):
    """x: (Bp,784) f32, labels: (Bp,10) f32, Bp a multiple of tb -> (1, Bp) f32."""
    w1a, w1b, p, c0 = kernel_params
    bp = x.shape[0]
    return pl.pallas_call(
        discriminator_kernel,
        out_shape=jax.ShapeDtypeStruct((1, bp), jnp.float32),
        grid_spec=pltpu.PrefetchScalarGridSpec(
            num_scalar_prefetch=0,
            grid=(bp // tb,),
            in_specs=[
                pl.BlockSpec((tb, D_IN), lambda i: (i, 0)),      # inputs: new tile per step
                pl.BlockSpec((tb, D_LBL), lambda i: (i, 0)),     # labels: new tile per step
                pl.BlockSpec((D_IN, HP), lambda i: (0, 0)),      # w1a: resident across steps
                pl.BlockSpec((D_LBL, HP), lambda i: (0, 0)),     # w1b: resident
                pl.BlockSpec((8, HP), lambda i: (0, 0)),         # packed per-lane params
                pl.BlockSpec((1, 1), lambda i: (0, 0)),          # scalar constant
            ],
            out_specs=pl.BlockSpec((1, tb), lambda i: (0, i)),   # lane-dense output row
        ),
        compiler_params=pltpu.CompilerParams(
            dimension_semantics=("parallel",)),                  # v7x: 2 TCs split the batch
    )(x, labels, w1a, w1b, p, c0)


def _choose_tb(b):
    """Largest batch tile in {512, 256, 128} that keeps >= 2 grid steps when possible
    (so both v7x TensorCores get work); small batches use a single/few 128-row tiles."""
    for tb in (512, 256):
        if b >= 2 * tb:
            return tb
    return 128


@jax.jit
def discriminator_forward_batch(inputs, labels, kernel_params):
    """inputs: (B, 784) f32, labels: (B, 10) f32 -> (B, 1) f32."""
    b = inputs.shape[0]
    tb = _choose_tb(b)
    bp = ((b + tb - 1) // tb) * tb
    x = inputs.astype(jnp.float32)
    l = labels.astype(jnp.float32)
    if bp != b:                       # ragged batch only: zero-pad rows (static shapes)
        x = jnp.pad(x, ((0, bp - b), (0, 0)))
        l = jnp.pad(l, ((0, bp - b), (0, 0)))
    out_row = _pallas_discriminator(x, l, kernel_params, tb)    # (1, bp)
    return out_row[0, :b, None]


def discriminator_forward(inputs, labels, kernel_params):
    """inputs: (784,), labels: (10,) -> (1,) — matches the PyTorch module's forward."""
    out = discriminator_forward_batch(inputs[None, :], labels[None, :], kernel_params)
    return out[0]


def prepare_params(params):
    """One-time offline prep: split/pad w1 to bf16 pieces and pack the small params."""
    w1, b1, gamma, beta, w2, b2 = params
    w2_row = w2[:, 0]                                            # (200,)
    w1a = jnp.zeros((D_IN, HP), jnp.float32).at[:, :D_H].set(w1[:D_IN, :]).astype(jnp.bfloat16)
    w1b = jnp.zeros((D_LBL, HP), jnp.float32).at[:, :D_H].set(w1[D_IN:, :]).astype(jnp.bfloat16)
    p = jnp.zeros((8, HP), jnp.float32)
    p = p.at[0, :D_H].set(b1)                                    # bias row
    p = p.at[1, :D_H].set(gamma * w2_row)                        # fused gamma*w2 row
    p = p.at[2, :D_H].set(1.0 / D_H)                             # mean / E[h^2] reducer
    p = p.at[3, :D_H].set(jnp.sum(gamma * w2_row) / D_H)         # -> mean * sum(gamma*w2)
    c0 = (jnp.sum(beta * w2_row) + b2[0]).reshape(1, 1).astype(jnp.float32)
    return (w1a, w1b, p, c0)


def init_params(key):
    """Deterministic parameter init (PyTorch-Linear-style uniform bounds)."""
    k1, k2, k3, k4 = jax.random.split(key, 4)
    d_k = D_IN + D_LBL
    bnd1 = 1.0 / jnp.sqrt(d_k)
    bnd2 = 1.0 / jnp.sqrt(D_H)
    w1 = jax.random.uniform(k1, (d_k, D_H), jnp.float32, -bnd1, bnd1)
    b1 = jax.random.uniform(k2, (D_H,), jnp.float32, -bnd1, bnd1)
    gamma = jnp.ones((D_H,), jnp.float32)    # LayerNorm weight
    beta = jnp.zeros((D_H,), jnp.float32)    # LayerNorm bias
    w2 = jax.random.uniform(k3, (D_H, 1), jnp.float32, -bnd2, bnd2)
    b2 = jax.random.uniform(k4, (1,), jnp.float32, -bnd2, bnd2)
    return (w1, b1, gamma, beta, w2, b2)


def discriminator_reference(inputs, labels, params):
    """Pure-JAX f32 reference (mirrors the PyTorch module exactly)."""
    w1, b1, gamma, beta, w2, b2 = params
    x = jnp.concatenate([inputs, labels], axis=-1)
    h = x @ w1 + b1
    h = jnp.where(h > 0, h, 0.02 * h)
    mean = jnp.mean(h, axis=-1, keepdims=True)
    var = jnp.mean((h - mean) ** 2, axis=-1, keepdims=True)
    hn = (h - mean) * jax.lax.rsqrt(var + _EPS) * gamma + beta
    return jax.nn.sigmoid(hn @ w2 + b2)


if __name__ == "__main__":
    key = jax.random.PRNGKey(0)
    kp, ki, kl = jax.random.split(key, 3)

    params = init_params(kp)
    kparams = prepare_params(params)

    B = 512                                        # -> TB=256, grid=2 (both v7x cores busy)
    inputs = jax.random.uniform(ki, (B, D_IN), jnp.float32)       # flattened 28x28 images
    labels = jax.nn.one_hot(jax.random.randint(kl, (B,), 0, 10), D_LBL).astype(jnp.float32)

    out = jax.block_until_ready(discriminator_forward_batch(inputs, labels, kparams))
    assert out.shape == (B, 1)
    assert bool(jnp.all((out >= 0.0) & (out <= 1.0)))            # exact sigmoid: BCE-safe

    # single-sample path (PyTorch forward signature) must agree with the batched path
    out1 = jax.block_until_ready(discriminator_forward(inputs[0], labels[0], kparams))
    assert out1.shape == (1,)
    assert bool(jnp.allclose(out1, out[0], atol=1e-5))

    # correctness vs a pure-JAX f32 reference (loose tol: bf16 weights + bf16 activations)
    ref = discriminator_reference(inputs, labels, params)
    err = float(jnp.max(jnp.abs(out - ref)))
    assert bool(jnp.allclose(out, ref, atol=3e-2)), err

    print("KERNEL_OK")
</pallas_src>

<mosaic_0001>
module attributes {stable_mosaic.version = 11 : i64} {
  func.func @discriminator_kernel(%arg0: i32, %arg1: memref<256x784xf32, #tpu.memory_space<vmem>>, %arg2: memref<256x10xf32, #tpu.memory_space<vmem>>, %arg3: memref<784x256xbf16, #tpu.memory_space<vmem>>, %arg4: memref<10x256xbf16, #tpu.memory_space<vmem>>, %arg5: memref<8x256xf32, #tpu.memory_space<vmem>>, %arg6: memref<1x1xf32, #tpu.memory_space<vmem>>, %arg7: memref<1x256xf32, #tpu.memory_space<vmem>>) attributes {dimension_semantics = [#tpu.dimension_semantics<parallel>], iteration_bounds = array<i64: 2>, scalar_prefetch = 0 : i64, scratch_operands = 0 : i64, tpu.core_type = #tpu.core_type<tc>, window_params = [{transform_indices = @transform_0, window_bounds = array<i64: 256, 784>}, {transform_indices = @transform_1, window_bounds = array<i64: 256, 10>}, {pipeline_mode = #tpu.pipeline_mode<synchronous>, transform_indices = @transform_2, window_bounds = array<i64: 784, 256>}, {pipeline_mode = #tpu.pipeline_mode<synchronous>, transform_indices = @transform_3, window_bounds = array<i64: 10, 256>}, {pipeline_mode = #tpu.pipeline_mode<synchronous>, transform_indices = @transform_4, window_bounds = array<i64: 8, 256>}, {pipeline_mode = #tpu.pipeline_mode<synchronous>, transform_indices = @transform_5, window_bounds = array<i64: 1, 1>}, {transform_indices = @transform_6, window_bounds = array<i64: 1, 256>}]} {
    %c0 = arith.constant 0 : index
    %c0_0 = arith.constant 0 : index
    %0 = vector.load %arg5[%c0, %c0_0] : memref<8x256xf32, #tpu.memory_space<vmem>>, vector<8x256xf32>
    %c0_1 = arith.constant 0 : index
    %c0_2 = arith.constant 0 : index
    %1 = vector.load %arg1[%c0_1, %c0_2] : memref<256x784xf32, #tpu.memory_space<vmem>>, vector<256x784xf32>
    %2 = arith.truncf %1 : vector<256x784xf32> to vector<256x784xbf16>
    %c0_3 = arith.constant 0 : index
    %c0_4 = arith.constant 0 : index
    %3 = vector.load %arg2[%c0_3, %c0_4] : memref<256x10xf32, #tpu.memory_space<vmem>>, vector<256x10xf32>
    %4 = arith.truncf %3 : vector<256x10xf32> to vector<256x10xbf16>
    %c0_5 = arith.constant 0 : index
    %c0_6 = arith.constant 0 : index
    %5 = vector.load %arg3[%c0_5, %c0_6] : memref<784x256xbf16, #tpu.memory_space<vmem>>, vector<784x256xbf16>
    %cst = arith.constant dense<0.000000e+00> : vector<256x256xf32>
    %6 = tpu.matmul %2, %5, %cst {dimension_numbers = #tpu.dot_dimension_numbers<[1], [0], [0], [1], [0, 0, 1, 1], [], []>} : vector<256x784xbf16>, vector<784x256xbf16>, vector<256x256xf32> -> vector<256x256xf32>
    %c0_7 = arith.constant 0 : index
    %c0_8 = arith.constant 0 : index
    %7 = vector.load %arg4[%c0_7, %c0_8] : memref<10x256xbf16, #tpu.memory_space<vmem>>, vector<10x256xbf16>
    %cst_9 = arith.constant dense<0.000000e+00> : vector<256x256xf32>
    %8 = tpu.matmul %4, %7, %cst_9 {dimension_numbers = #tpu.dot_dimension_numbers<[1], [0], [0], [1], [0, 0, 1, 1], [], []>} : vector<256x10xbf16>, vector<10x256xbf16>, vector<256x256xf32> -> vector<256x256xf32>
    %9 = arith.addf %6, %8 : vector<256x256xf32>
    %10 = vector.extract_strided_slice %0 {offsets = [0, 0], sizes = [1, 256], strides = [1, 1]} : vector<8x256xf32> to vector<1x256xf32>
    %11 = vector.broadcast %10 : vector<1x256xf32> to vector<256x256xf32>
    %12 = arith.addf %9, %11 : vector<256x256xf32>
    %cst_10 = arith.constant 0.000000e+00 : f32
    %13 = vector.broadcast %cst_10 : f32 to vector<256x256xf32>
    %14 = arith.cmpf ogt, %12, %13 : vector<256x256xf32>
    %cst_11 = arith.constant 2.000000e-02 : f32
    %15 = vector.broadcast %cst_11 : f32 to vector<256x256xf32>
    %16 = arith.mulf %15, %12 : vector<256x256xf32>
    %17 = arith.select %14, %12, %16 : vector<256x256xi1>, vector<256x256xf32>
    %cst_12 = arith.constant dense<0.000000e+00> : vector<8x256xf32>
    %18 = tpu.matmul %0, %17, %cst_12 {dimension_numbers = #tpu.dot_dimension_numbers<[1], [1], [0], [0], [0, 0, 1, 0], [], []>} : vector<8x256xf32>, vector<256x256xf32>, vector<8x256xf32> -> vector<8x256xf32>
    %19 = arith.mulf %17, %17 : vector<256x256xf32>
    %cst_13 = arith.constant dense<0.000000e+00> : vector<8x256xf32>
    %20 = tpu.matmul %0, %19, %cst_13 {dimension_numbers = #tpu.dot_dimension_numbers<[1], [1], [0], [0], [0, 0, 1, 0], [], []>} : vector<8x256xf32>, vector<256x256xf32>, vector<8x256xf32> -> vector<8x256xf32>
    %21 = vector.extract_strided_slice %18 {offsets = [1, 0], sizes = [1, 256], strides = [1, 1]} : vector<8x256xf32> to vector<1x256xf32>
    %22 = vector.extract_strided_slice %18 {offsets = [2, 0], sizes = [1, 256], strides = [1, 1]} : vector<8x256xf32> to vector<1x256xf32>
    %23 = vector.extract_strided_slice %18 {offsets = [3, 0], sizes = [1, 256], strides = [1, 1]} : vector<8x256xf32> to vector<1x256xf32>
    %24 = vector.extract_strided_slice %20 {offsets = [2, 0], sizes = [1, 256], strides = [1, 1]} : vector<8x256xf32> to vector<1x256xf32>
    %25 = arith.mulf %22, %22 : vector<1x256xf32>
    %26 = arith.subf %24, %25 : vector<1x256xf32>
    %cst_14 = arith.constant 9.99999974E-6 : f32
    %27 = vector.broadcast %cst_14 : f32 to vector<1x256xf32>
    %28 = arith.addf %26, %27 : vector<1x256xf32>
    %29 = math.rsqrt %28 : vector<1x256xf32>
    %30 = arith.subf %21, %23 : vector<1x256xf32>
    %31 = arith.mulf %29, %30 : vector<1x256xf32>
    %c0_15 = arith.constant 0 : index
    %c0_16 = arith.constant 0 : index
    %32 = vector.load %arg6[%c0_15, %c0_16] : memref<1x1xf32, #tpu.memory_space<vmem>>, vector<1x1xf32>
    %33 = vector.broadcast %32 : vector<1x1xf32> to vector<1x256xf32>
    %34 = arith.addf %31, %33 : vector<1x256xf32>
    %cst_17 = arith.constant 0.000000e+00 : f32
    %35 = vector.broadcast %cst_17 : f32 to vector<1x256xf32>
    %36 = arith.subf %35, %34 : vector<1x256xf32>
    %37 = math.exp %36 : vector<1x256xf32>
    %cst_18 = arith.constant 1.000000e+00 : f32
    %38 = vector.broadcast %cst_18 : f32 to vector<1x256xf32>
    %39 = arith.addf %38, %37 : vector<1x256xf32>
    %cst_19 = arith.constant 1.000000e+00 : f32
    %40 = vector.broadcast %cst_19 : f32 to vector<1x256xf32>
    %41 = arith.divf %40, %39 : vector<1x256xf32>
    %c0_20 = arith.constant 0 : index
    %c0_21 = arith.constant 0 : index
    %42 = vector.load %arg7[%c0_20, %c0_21] : memref<1x256xf32, #tpu.memory_space<vmem>>, vector<1x256xf32>
    tpu.vector_store %arg7[%c0_20, %c0_21], %41 {strides = array<i32>} : memref<1x256xf32, #tpu.memory_space<vmem>>, vector<1x256xf32>,
    return
  }
  func.func @transform_0(%arg0: i32) -> (i32, i32) {
    %c0_i32 = arith.constant 0 : i32
    %c0_i32_0 = arith.constant 0 : i32
    return %arg0, %c0_i32 : i32, i32
  }
  func.func @transform_1(%arg0: i32) -> (i32, i32) {
    %c0_i32 = arith.constant 0 : i32
    %c0_i32_0 = arith.constant 0 : i32
    return %arg0, %c0_i32 : i32, i32
  }
  func.func @transform_2(%arg0: i32) -> (i32, i32) {
    %c0_i32 = arith.constant 0 : i32
    %c0_i32_0 = arith.constant 0 : i32
    %c0_i32_1 = arith.constant 0 : i32
    return %c0_i32, %c0_i32_0 : i32, i32
  }
  func.func @transform_3(%arg0: i32) -> (i32, i32) {
    %c0_i32 = arith.constant 0 : i32
    %c0_i32_0 = arith.constant 0 : i32
    %c0_i32_1 = arith.constant 0 : i32
    return %c0_i32, %c0_i32_0 : i32, i32
  }
  func.func @transform_4(%arg0: i32) -> (i32, i32) {
    %c0_i32 = arith.constant 0 : i32
    %c0_i32_0 = arith.constant 0 : i32
    %c0_i32_1 = arith.constant 0 : i32
    return %c0_i32, %c0_i32_0 : i32, i32
  }
  func.func @transform_5(%arg0: i32) -> (i32, i32) {
    %c0_i32 = arith.constant 0 : i32
    %c0_i32_0 = arith.constant 0 : i32
    %c0_i32_1 = arith.constant 0 : i32
    return %c0_i32, %c0_i32_0 : i32, i32
  }
  func.func @transform_6(%arg0: i32) -> (i32, i32) {
    %c0_i32 = arith.constant 0 : i32
    %c0_i32_0 = arith.constant 0 : i32
    return %c0_i32, %arg0 : i32, i32
  }
}

</mosaic_0001>

<llo_original>
// kernel: discriminator_forward_batch.1
$region0: #{discriminator_forward_batch.1}
  #allocation0 [shape = 'u32[]', space=smem, size = 0x4, offset = 0x4, fixed_abs, tag = 'smem constant byte address 0x4 - core index']
  #allocation1 [shape = 'u32[144,128]{1,0:T(1,128)}', space=vmem, size = 0x12000, scoped, tag = 'internal scratch']
  #allocation2 [shape = 'f32[1,1]{1,0:T(1,128)S(1)}', space=vmem, size = 0x200, scoped, tag = 'scoped memory for discriminator_forward_batch.1']
  %s0 = inlined_call_operand.vmem [shape: f32[512,784], index: 0, kind: input, shape index: {}]
  %s1 = inlined_call_operand.vmem [shape: f32[512,10], index: 1, kind: input, shape index: {}]
  %s2 = inlined_call_operand.vmem [shape: bf16[784,256], index: 2, kind: input, shape index: {}]
  %s3 = inlined_call_operand.vmem [shape: bf16[10,256], index: 3, kind: input, shape index: {}]
  %s4 = inlined_call_operand.vmem [shape: f32[8,256], index: 4, kind: input, shape index: {}]
  %s5 = inlined_call_operand.<no memory space> [shape: f32[1,1], index: 5, kind: input, shape index: {}]
  %s6 = inlined_call_operand.hbm [shape: f32[1,512], index: 6, kind: output, shape index: {}]
  %s7 = sld [smem:[#allocation0]]
  $region57: #{discriminator_forward_batch.1} parent=0
    _
  %s9 = ssub.s32 1, %s7
  %s10 = scalar_select 0, %s9, %s7
  %v11 = vstv %s5
  %12 = vst [vmem:[#allocation2] sm:$0x1] %v11
  $region1: #{discriminator_forward_batch.1} parent=0
    #allocation3 [shape = 'u8[2048]{0}', space=vmem, size = 0x800, scoped, tag = 'output window, operand 0']
    #allocation4 [shape = 's32[2]{0}', space=sflag, size = 0x8, scoped, tag = 'scoped memory for discriminator_forward_batch.1']
    %13 = vsyncpa [#allocation4], 0
    %s14 = scalar_lea.sflag [#allocation4], 1
    %15 = vsyncpa %s14, 0
    loop: start=0, step=1, limit=4
    $region2: #{discriminator_forward_batch.1} parent=1 // loop_pre_header
      _
    $region3: #{discriminator_forward_batch.1} parent=1 // loop_header
      %s17 = sphi 0, %s21
      %p18 = scmp.ge.s32.totalorder %s17, 4
      %s27 = sphi 0, %s29
      %s30 = sphi 0, %s27
      %s31 = sphi 0, %s30
      %s47 = sphi 0, %s31
      %s53 = sphi 0, %s55
      %s56 = sphi 0, %s53
      %s57 = sphi 0, %s56
      %s73 = sphi 0, %s57
      %s77 = sphi 0, %s77
      %s79 = sphi 0, %s77
      %s80 = sphi 0, %s79
      %s94 = sphi 0, %s80
      %s98 = sphi 0, %s98
      %s100 = sphi 0, %s98
      %s101 = sphi 0, %s100
      %s115 = sphi 0, %s101
      %s119 = sphi 0, %s119
      %s121 = sphi 0, %s119
      %s122 = sphi 0, %s121
      %s136 = sphi 0, %s122
      %s140 = sphi 0, %s140
      %s142 = sphi 0, %s140
      %s143 = sphi 0, %s142
      %s157 = sphi 0, %s143
      %s163 = sphi 0, %s165
      %s166 = sphi 0, %s163
      %s167 = sphi 0, %s166
      %s183 = sphi 0, %s167
    $region4: #{discriminator_forward_batch.1} parent=1 // loop_header_branch
      %20 = sbr.rel (%p18) target = $region8
    $region5: #{discriminator_forward_batch.1} parent=1 // loop_body
      %s22 = ssub.s32 %s17, 1
      %s23 = ssub.s32 %s17, 2
      %s24 = sadd.s32 %s17, 1
      %s25 = ssub.s32 %s17, %s24
      %p26 = scmp.eq.s32.totalorder %s25, 0
      %s28 = sadd.s32 %s27, 1
      %s29 = scalar_select %p26, %s27, %s28
      %p32 = pneg %p26
      %p33 = scmp.eq.s32.totalorder %s17, 1
      %p34 = por %p32, %p33
      %p35 = scmp.ne.s32.totalorder %s27, %s30
      %p36 = scmp.eq.s32.totalorder %s17, 0
      %p37 = por %p35, %p36
      %p38 = scmp.ne.s32.totalorder %s27, %s30
      %p39 = scmp.eq.s32.totalorder %s22, 1
      %p40 = por %p38, %p39
      %p41 = scmp.ne.s32.totalorder %s30, %s31
      %p42 = scmp.eq.s32.totalorder %s22, 0
      %p43 = por %p41, %p42
      %p44 = scmp.ne.s32.totalorder %s30, %s31
      %p45 = scmp.eq.s32.totalorder %s23, 1
      %p46 = por %p44, %p45
      %p48 = scmp.ne.s32.totalorder %s31, %s47
      %p49 = scmp.eq.s32.totalorder %s23, 0
      %p50 = por %p48, %p49
      %s51 = ssub.s32 %s17, %s24
      %p52 = scmp.eq.s32.totalorder %s51, 0
      %s54 = sadd.s32 %s53, 1
      %s55 = scalar_select %p52, %s53, %s54
      %p58 = pneg %p52
      %p59 = scmp.eq.s32.totalorder %s17, 1
      %p60 = por %p58, %p59
      %p61 = scmp.ne.s32.totalorder %s53, %s56
      %p62 = scmp.eq.s32.totalorder %s17, 0
      %p63 = por %p61, %p62
      %p64 = scmp.ne.s32.totalorder %s53, %s56
      %p65 = scmp.eq.s32.totalorder %s22, 1
      %p66 = por %p64, %p65
      %p67 = scmp.ne.s32.totalorder %s56, %s57
      %p68 = scmp.eq.s32.totalorder %s22, 0
      %p69 = por %p67, %p68
      %p70 = scmp.ne.s32.totalorder %s56, %s57
      %p71 = scmp.eq.s32.totalorder %s23, 1
      %p72 = por %p70, %p71
      %p74 = scmp.ne.s32.totalorder %s57, %s73
      %p75 = scmp.eq.s32.totalorder %s23, 0
      %p76 = por %p74, %p75
      %s78 = sadd.s32 %s77, 1
      %p81 = scmp.eq.s32.totalorder %s17, 1
      %p82 = scmp.ne.s32.totalorder %s77, %s79
      %p83 = scmp.eq.s32.totalorder %s17, 0
      %p84 = por %p82, %p83
      %p85 = scmp.ne.s32.totalorder %s77, %s79
      %p86 = scmp.eq.s32.totalorder %s22, 1
      %p87 = por %p85, %p86
      %p88 = scmp.ne.s32.totalorder %s79, %s80
      %p89 = scmp.eq.s32.totalorder %s22, 0
      %p90 = por %p88, %p89
      %p91 = scmp.ne.s32.totalorder %s79, %s80
      %p92 = scmp.eq.s32.totalorder %s23, 1
      %p93 = por %p91, %p92
      %p95 = scmp.ne.s32.totalorder %s80, %s94
      %p96 = scmp.eq.s32.totalorder %s23, 0
      %p97 = por %p95, %p96
      %s99 = sadd.s32 %s98, 1
      %p102 = scmp.eq.s32.totalorder %s17, 1
      %p103 = scmp.ne.s32.totalorder %s98, %s100
      %p104 = scmp.eq.s32.totalorder %s17, 0
      %p105 = por %p103, %p104
      %p106 = scmp.ne.s32.totalorder %s98, %s100
      %p107 = scmp.eq.s32.totalorder %s22, 1
      %p108 = por %p106, %p107
      %p109 = scmp.ne.s32.totalorder %s100, %s101
      %p110 = scmp.eq.s32.totalorder %s22, 0
      %p111 = por %p109, %p110
      %p112 = scmp.ne.s32.totalorder %s100, %s101
      %p113 = scmp.eq.s32.totalorder %s23, 1
      %p114 = por %p112, %p113
      %p116 = scmp.ne.s32.totalorder %s101, %s115
      %p117 = scmp.eq.s32.totalorder %s23, 0
      %p118 = por %p116, %p117
      %s120 = sadd.s32 %s119, 1
      %p123 = scmp.eq.s32.totalorder %s17, 1
      %p124 = scmp.ne.s32.totalorder %s119, %s121
      %p125 = scmp.eq.s32.totalorder %s17, 0
      %p126 = por %p124, %p125
      %p127 = scmp.ne.s32.totalorder %s119, %s121
      %p128 = scmp.eq.s32.totalorder %s22, 1
      %p129 = por %p127, %p128
      %p130 = scmp.ne.s32.totalorder %s121, %s122
      %p131 = scmp.eq.s32.totalorder %s22, 0
      %p132 = por %p130, %p131
      %p133 = scmp.ne.s32.totalorder %s121, %s122
      %p134 = scmp.eq.s32.totalorder %s23, 1
      %p135 = por %p133, %p134
      %p137 = scmp.ne.s32.totalorder %s122, %s136
      %p138 = scmp.eq.s32.totalorder %s23, 0
      %p139 = por %p137, %p138
      %s141 = sadd.s32 %s140, 1
      %p144 = scmp.eq.s32.totalorder %s17, 1
      %p145 = scmp.ne.s32.totalorder %s140, %s142
      %p146 = scmp.eq.s32.totalorder %s17, 0
      %p147 = por %p145, %p146
      %p148 = scmp.ne.s32.totalorder %s140, %s142
      %p149 = scmp.eq.s32.totalorder %s22, 1
      %p150 = por %p148, %p149
      %p151 = scmp.ne.s32.totalorder %s142, %s143
      %p152 = scmp.eq.s32.totalorder %s22, 0
      %p153 = por %p151, %p152
      %p154 = scmp.ne.s32.totalorder %s142, %s143
      %p155 = scmp.eq.s32.totalorder %s23, 1
      %p156 = por %p154, %p155
      %p158 = scmp.ne.s32.totalorder %s143, %s157
      %p159 = scmp.eq.s32.totalorder %s23, 0
      %p160 = por %p158, %p159
      %s161 = ssub.s32 %s17, %s24
      %p162 = scmp.eq.s32.totalorder %s161, 0
      %s164 = sadd.s32 %s163, 1
      %s165 = scalar_select %p162, %s163, %s164
      %p168 = pneg %p162
      %p169 = scmp.eq.s32.totalorder %s17, 1
      %p170 = por %p168, %p169
      %p171 = scmp.ne.s32.totalorder %s163, %s166
      %p172 = scmp.eq.s32.totalorder %s17, 0
      %p173 = por %p171, %p172
      %p174 = scmp.ne.s32.totalorder %s163, %s166
      %p175 = scmp.eq.s32.totalorder %s22, 1
      %p176 = por %p174, %p175
      %p177 = scmp.ne.s32.totalorder %s166, %s167
      %p178 = scmp.eq.s32.totalorder %s22, 0
      %p179 = por %p177, %p178
      %p180 = scmp.ne.s32.totalorder %s166, %s167
      %p181 = scmp.eq.s32.totalorder %s23, 1
      %p182 = por %p180, %p181
      %p184 = scmp.ne.s32.totalorder %s167, %s183
      %p185 = scmp.eq.s32.totalorder %s23, 0
      %p186 = por %p184, %p185
      %p187 = scmp.le.s32.totalorder 1, %s17
      %p188 = scmp.lt.s32.totalorder %s17, 3
      %p189 = pnand %p187, %p188
      %p190 = pneg %p189
      // Predicated region
      $region9: #{discriminator_forward_batch.1} parent=5 // pred_check
        _
      $region10: #{discriminator_forward_batch.1} parent=5 // pred_check_branch
        %192 = sbr.rel (%p189) target = $region12
      $region11: #{discriminator_forward_batch.1} parent=5 // pred_region
        %s193 = ssub.s32 %s17, 1
        // Predicated region
        $region13: #{discriminator_forward_batch.1} parent=11 // pred_check
          %p194 = pneg %p90
        $region14: #{discriminator_forward_batch.1} parent=11 // pred_check_branch
          %196 = sbr.rel (%p194) target = $region16
        $region15: #{discriminator_forward_batch.1} parent=11 // pred_region
          _
        $region16: #{discriminator_forward_batch.1} parent=11 // pred_fallthru
          _
        // Predicated region
        $region17: #{discriminator_forward_batch.1} parent=11 // pred_check
          %p197 = pneg %p111
        $region18: #{discriminator_forward_batch.1} parent=11 // pred_check_branch
          %199 = sbr.rel (%p197) target = $region20
        $region19: #{discriminator_forward_batch.1} parent=11 // pred_region
          _
        $region20: #{discriminator_forward_batch.1} parent=11 // pred_fallthru
          _
        // Predicated region
        $region21: #{discriminator_forward_batch.1} parent=11 // pred_check
          %p200 = pneg %p132
        $region22: #{discriminator_forward_batch.1} parent=11 // pred_check_branch
          %202 = sbr.rel (%p200) target = $region24
        $region23: #{discriminator_forward_batch.1} parent=11 // pred_region
          _
        $region24: #{discriminator_forward_batch.1} parent=11 // pred_fallthru
          _
        // Predicated region
        $region25: #{discriminator_forward_batch.1} parent=11 // pred_check
          %p203 = pneg %p153
        $region26: #{discriminator_forward_batch.1} parent=11 // pred_check_branch
          %205 = sbr.rel (%p203) target = $region28
        $region27: #{discriminator_forward_batch.1} parent=11 // pred_region
          _
        $region28: #{discriminator_forward_batch.1} parent=11 // pred_fallthru
          _
      $region12: #{discriminator_forward_batch.1} parent=5 // pred_fallthru
        _
      %p206 = scmp.lt.s32.totalorder %s17, 2
      // Predicated region
      $region29: #{discriminator_forward_batch.1} parent=5 // pred_check
        %p207 = pneg %p206
      $region30: #{discriminator_forward_batch.1} parent=5 // pred_check_branch
        %209 = sbr.rel (%p207) target = $region32
      $region31: #{discriminator_forward_batch.1} parent=5 // pred_region
        // Predicated region
        $region33: #{discriminator_forward_batch.1} parent=31 // pred_check
          %p210 = pneg %p37
        $region34: #{discriminator_forward_batch.1} parent=31 // pred_check_branch
          %212 = sbr.rel (%p210) target = $region36
        $region35: #{discriminator_forward_batch.1} parent=31 // pred_region
          %s213 = smul.u32 32, %s17
          %p214 = scmp.lt.s32.totalorder %s213, 63
          %s215 = scalar_select %p214, %s213, 63
          %s216 = smul.addr %s215, 7
          %s217 = smul.addr %s216, 8
          %s218 = scalar_lea.vmem %s0, %s217
          %s219 = smul.u32 32, %s17
        $region36: #{discriminator_forward_batch.1} parent=31 // pred_fallthru
          _
        // Predicated region
        $region37: #{discriminator_forward_batch.1} parent=31 // pred_check
          %p220 = pneg %p63
        $region38: #{discriminator_forward_batch.1} parent=31 // pred_check_branch
          %222 = sbr.rel (%p220) target = $region40
        $region39: #{discriminator_forward_batch.1} parent=31 // pred_region
          %s223 = smul.u32 32, %s17
          %p224 = scmp.lt.s32.totalorder %s223, 63
          %s225 = scalar_select %p224, %s223, 63
          %s226 = smul.addr %s225, 8
          %s227 = scalar_lea.vmem %s1, %s226
          %s228 = smul.u32 32, %s17
        $region40: #{discriminator_forward_batch.1} parent=31 // pred_fallthru
          _
      $region32: #{discriminator_forward_batch.1} parent=5 // pred_fallthru
        _
      %p229 = scmp.le.s32.totalorder 1, %s17
      %p230 = scmp.lt.s32.totalorder %s17, 3
      %p231 = pnand %p229, %p230
      %p232 = pneg %p231
      // Predicated region
      $region41: #{discriminator_forward_batch.1} parent=5 // pred_check
        _
      $region42: #{discriminator_forward_batch.1} parent=5 // pred_check_branch
        %234 = sbr.rel (%p231) target = $region44
      $region43: #{discriminator_forward_batch.1} parent=5 // pred_region
        %s235 = ssub.s32 %s17, 1
        %s236 = smul.u32 32, %s22
        %p237 = scmp.lt.s32.totalorder %s236, 63
        %s238 = scalar_select %p237, %s236, 63
        %s239 = smul.addr %s238, 7
        %s240 = smul.addr %s239, 8
        %s241 = scalar_lea.vmem %s0, %s240
        %p242 = pneg %p43
        %p243 = pneg %p40
        %s244 = smul.u32 32, %s22
        %p245 = scmp.lt.s32.totalorder %s244, 63
        %s246 = scalar_select %p245, %s244, 63
        %s247 = smul.addr %s246, 8
        %s248 = scalar_lea.vmem %s1, %s247
        %p249 = pneg %p69
        %p250 = pneg %p66
        %p251 = pneg %p90
        %p252 = pneg %p87
        %p253 = pneg %p111
        %p254 = pneg %p108
        %p255 = pneg %p132
        %p256 = pneg %p129
        %p257 = pneg %p153
        %p258 = pneg %p150
        %p259 = pneg %p179
        %p260 = pneg %p176
        %s261 = sand.u32 %s166, 1
        %s262 = scalar_lea.sflag [#allocation4], %s261
        %s263 = sand.u32 %s166, 1
        %s264 = smul.addr %s263, 2
        %s265 = scalar_lea.vmem [#allocation3], %s264
        %s266 = smul.u32 32, %s22
        %p267 = scmp.lt.s32.totalorder %s266, 63
        %s268 = scalar_select %p267, %s266, 63
        %s269 = smul.addr %s268, 7
        %s270 = smul.addr %s269, 8
        %s271 = scalar_lea.vmem %s0, %s270
        %s272 = smul.u32 32, %s22
        %s273 = smul.u32 32, %s22
        %p274 = scmp.lt.s32.totalorder %s273, 63
        %s275 = scalar_select %p274, %s273, 63
        %s276 = smul.addr %s275, 8
        %s277 = scalar_lea.vmem %s1, %s276
        %s278 = smul.u32 32, %s22
        %s279 = smul.u32 2, %s22
        %v281 = vld [vmem:[%s4] sm:$0xff]
        %v282 = vld [vmem:[%s4 + $0x8] sm:$0xff]
        %v283 = vld [vmem:[%s271] sm:$0xff]
        %v284 = vld [vmem:[%s271 + $0x8] sm:$0xff]
        %v285 = vld [vmem:[%s271 + $0x10] sm:$0xff]
        %v286 = vld [vmem:[%s271 + $0x18] sm:$0xff]
        %v287 = vld [vmem:[%s271 + $0x20] sm:$0xff]
        %v288 = vld [vmem:[%s271 + $0x28] sm:$0xff]
        %v289 = vld [vmem:[%s271 + $0x30] sm:$0xff]
        %v290 = vld [vmem:[%s271 + $0x38] sm:$0xff]
        %v291 = vld [vmem:[%s271 + $0x40] sm:$0xff]
        %v292 = vld [vmem:[%s271 + $0x48] sm:$0xff]
        %v293 = vld [vmem:[%s271 + $0x50] sm:$0xff]
        %v294 = vld [vmem:[%s271 + $0x58] sm:$0xff]
        %v295 = vld [vmem:[%s271 + $0x60] sm:$0xff]
        %v296 = vld [vmem:[%s271 + $0x68] sm:$0xff]
        %v297 = vld [vmem:[%s271 + $0x70] sm:$0xff]
        %v298 = vld [vmem:[%s271 + $0x78] sm:$0xff]
        %v299 = vld [vmem:[%s271 + $0x80] sm:$0xff]
        %v300 = vld [vmem:[%s271 + $0x88] sm:$0xff]
        %v301 = vld [vmem:[%s271 + $0x90] sm:$0xff]
        %v302 = vld [vmem:[%s271 + $0x98] sm:$0xff]
        %v303 = vld [vmem:[%s271 + $0xa0] sm:$0xff]
        %v304 = vld [vmem:[%s271 + $0xa8] sm:$0xff]
        %v305 = vld [vmem:[%s271 + $0xb0] sm:$0xff]
        %v306 = vld [vmem:[%s271 + $0xb8] sm:$0xff]
        %v307 = vld [vmem:[%s271 + $0xc0] sm:$0xff]
        %v308 = vld [vmem:[%s271 + $0xc8] sm:$0xff]
        %v309 = vld [vmem:[%s271 + $0xd0] sm:$0xff]
        %v310 = vld [vmem:[%s271 + $0xd8] sm:$0xff]
        %v311 = vld [vmem:[%s271 + $0xe0] sm:$0xff]
        %v312 = vld [vmem:[%s271 + $0xe8] sm:$0xff]
        %v313 = vld [vmem:[%s271 + $0xf0] sm:$0xff]
        %v314 = vld [vmem:[%s271 + $0xf8] sm:$0xff]
        %v315 = vld [vmem:[%s271 + $0x100] sm:$0xff]
        %v316 = vld [vmem:[%s271 + $0x108] sm:$0xff]
        %v317 = vld [vmem:[%s271 + $0x110] sm:$0xff]
        %v318 = vld [vmem:[%s271 + $0x118] sm:$0xff]
        %v319 = vld [vmem:[%s271 + $0x120] sm:$0xff]
        %v320 = vld [vmem:[%s271 + $0x128] sm:$0xff]
        %v321 = vld [vmem:[%s271 + $0x130] sm:$0xff]
        %v322 = vld [vmem:[%s271 + $0x138] sm:$0xff]
        %v323 = vld [vmem:[%s271 + $0x140] sm:$0xff]
        %v324 = vld [vmem:[%s271 + $0x148] sm:$0xff]
        %v325 = vld [vmem:[%s271 + $0x150] sm:$0xff]
        %v326 = vld [vmem:[%s271 + $0x158] sm:$0xff]
        %v327 = vld [vmem:[%s271 + $0x160] sm:$0xff]
        %v328 = vld [vmem:[%s271 + $0x168] sm:$0xff]
        %v329 = vld [vmem:[%s271 + $0x170] sm:$0xff]
        %v330 = vld [vmem:[%s271 + $0x178] sm:$0xff]
        %v331 = vld [vmem:[%s271 + $0x180] sm:$0xff]
        %v332 = vld [vmem:[%s271 + $0x188] sm:$0xff]
        %v333 = vld [vmem:[%s271 + $0x190] sm:$0xff]
        %v334 = vld [vmem:[%s271 + $0x198] sm:$0xff]
        %v335 = vld [vmem:[%s271 + $0x1a0] sm:$0xff]
        %v336 = vld [vmem:[%s271 + $0x1a8] sm:$0xff]
        %v337 = vld [vmem:[%s271 + $0x1b0] sm:$0xff]
        %v338 = vld [vmem:[%s271 + $0x1b8] sm:$0xff]
        %v339 = vld [vmem:[%s271 + $0x1c0] sm:$0xff]
        %v340 = vld [vmem:[%s271 + $0x1c8] sm:$0xff]
        %v341 = vld [vmem:[%s271 + $0x1d0] sm:$0xff]
        %v342 = vld [vmem:[%s271 + $0x1d8] sm:$0xff]
        %v343 = vld [vmem:[%s271 + $0x1e0] sm:$0xff]
        %v344 = vld [vmem:[%s271 + $0x1e8] sm:$0xff]
        %v345 = vld [vmem:[%s271 + $0x1f0] sm:$0xff]
        %v346 = vld [vmem:[%s271 + $0x1f8] sm:$0xff]
        %v347 = vld [vmem:[%s271 + $0x200] sm:$0xff]
        %v348 = vld [vmem:[%s271 + $0x208] sm:$0xff]
        %v349 = vld [vmem:[%s271 + $0x210] sm:$0xff]
        %v350 = vld [vmem:[%s271 + $0x218] sm:$0xff]
        %v351 = vld [vmem:[%s271 + $0x220] sm:$0xff]
        %v352 = vld [vmem:[%s271 + $0x228] sm:$0xff]
        %v353 = vld [vmem:[%s271 + $0x230] sm:$0xff]
        %v354 = vld [vmem:[%s271 + $0x238] sm:$0xff]
        %v355 = vld [vmem:[%s271 + $0x240] sm:$0xff]
        %v356 = vld [vmem:[%s271 + $0x248] sm:$0xff]
        %v357 = vld [vmem:[%s271 + $0x250] sm:$0xff]
        %v358 = vld [vmem:[%s271 + $0x258] sm:$0xff]
        %v359 = vld [vmem:[%s271 + $0x260] sm:$0xff]
        %v360 = vld [vmem:[%s271 + $0x268] sm:$0xff]
        %v361 = vld [vmem:[%s271 + $0x270] sm:$0xff]
        %v362 = vld [vmem:[%s271 + $0x278] sm:$0xff]
        %v363 = vld [vmem:[%s271 + $0x280] sm:$0xff]
        %v364 = vld [vmem:[%s271 + $0x288] sm:$0xff]
        %v365 = vld [vmem:[%s271 + $0x290] sm:$0xff]
        %v366 = vld [vmem:[%s271 + $0x298] sm:$0xff]
        %v367 = vld [vmem:[%s271 + $0x2a0] sm:$0xff]
        %v368 = vld [vmem:[%s271 + $0x2a8] sm:$0xff]
        %v369 = vld [vmem:[%s271 + $0x2b0] sm:$0xff]
        %v370 = vld [vmem:[%s271 + $0x2b8] sm:$0xff]
        %v371 = vld [vmem:[%s271 + $0x2c0] sm:$0xff]
        %v372 = vld [vmem:[%s271 + $0x2c8] sm:$0xff]
        %v373 = vld [vmem:[%s271 + $0x2d0] sm:$0xff]
        %v374 = vld [vmem:[%s271 + $0x2d8] sm:$0xff]
        %v375 = vld [vmem:[%s271 + $0x2e0] sm:$0xff]
        %v376 = vld [vmem:[%s271 + $0x2e8] sm:$0xff]
        %v377 = vld [vmem:[%s271 + $0x2f0] sm:$0xff]
        %v378 = vld [vmem:[%s271 + $0x2f8] sm:$0xff]
        %v379 = vld [vmem:[%s271 + $0x300] sm:$0xff]
        %v380 = vld [vmem:[%s271 + $0x308] sm:$0xff]
        %v381 = vld [vmem:[%s271 + $0x310] sm:$0xff]
        %v382 = vld [vmem:[%s271 + $0x318] sm:$0xff]
        %v383 = vld [vmem:[%s271 + $0x320] sm:$0xff]
        %v384 = vld [vmem:[%s271 + $0x328] sm:$0xff]
        %v385 = vld [vmem:[%s271 + $0x330] sm:$0xff]
        %v386 = vld [vmem:[%s271 + $0x338] sm:$0xff]
        %v387 = vld [vmem:[%s271 + $0x340] sm:$0xff]
        %v388 = vld [vmem:[%s271 + $0x348] sm:$0xff]
        %v389 = vld [vmem:[%s271 + $0x350] sm:$0xff]
        %v390 = vld [vmem:[%s271 + $0x358] sm:$0xff]
        %v391 = vld [vmem:[%s271 + $0x360] sm:$0xff]
        %v392 = vld [vmem:[%s271 + $0x368] sm:$0xff]
        %v393 = vld [vmem:[%s271 + $0x370] sm:$0xff]
        %v394 = vld [vmem:[%s271 + $0x378] sm:$0xff]
        %v395 = vld [vmem:[%s271 + $0x380] sm:$0xff]
        %v396 = vld [vmem:[%s271 + $0x388] sm:$0xff]
        %v397 = vld [vmem:[%s271 + $0x390] sm:$0xff]
        %v398 = vld [vmem:[%s271 + $0x398] sm:$0xff]
        %v399 = vld [vmem:[%s271 + $0x3a0] sm:$0xff]
        %v400 = vld [vmem:[%s271 + $0x3a8] sm:$0xff]
        %v401 = vld [vmem:[%s271 + $0x3b0] sm:$0xff]
        %v402 = vld [vmem:[%s271 + $0x3b8] sm:$0xff]
        %v403 = vld [vmem:[%s271 + $0x3c0] sm:$0xff]
        %v404 = vld [vmem:[%s271 + $0x3c8] sm:$0xff]
        %v405 = vld [vmem:[%s271 + $0x3d0] sm:$0xff]
        %v406 = vld [vmem:[%s271 + $0x3d8] sm:$0xff]
        %v407 = vld [vmem:[%s271 + $0x3e0] sm:$0xff]
        %v408 = vld [vmem:[%s271 + $0x3e8] sm:$0xff]
        %v409 = vld [vmem:[%s271 + $0x3f0] sm:$0xff]
        %v410 = vld [vmem:[%s271 + $0x3f8] sm:$0xff]
        %v411 = vld [vmem:[%s271 + $0x400] sm:$0xff]
        %v412 = vld [vmem:[%s271 + $0x408] sm:$0xff]
        %v413 = vld [vmem:[%s271 + $0x410] sm:$0xff]
        %v414 = vld [vmem:[%s271 + $0x418] sm:$0xff]
        %v415 = vld [vmem:[%s271 + $0x420] sm:$0xff]
        %v416 = vld [vmem:[%s271 + $0x428] sm:$0xff]
        %v417 = vld [vmem:[%s271 + $0x430] sm:$0xff]
        %v418 = vld [vmem:[%s271 + $0x438] sm:$0xff]
        %v419 = vld [vmem:[%s271 + $0x440] sm:$0xff]
        %v420 = vld [vmem:[%s271 + $0x448] sm:$0xff]
        %v421 = vld [vmem:[%s271 + $0x450] sm:$0xff]
        %v422 = vld [vmem:[%s271 + $0x458] sm:$0xff]
        %v423 = vld [vmem:[%s271 + $0x460] sm:$0xff]
        %v424 = vld [vmem:[%s271 + $0x468] sm:$0xff]
        %v425 = vld [vmem:[%s271 + $0x470] sm:$0xff]
        %v426 = vld [vmem:[%s271 + $0x478] sm:$0xff]
        %v427 = vld [vmem:[%s271 + $0x480] sm:$0xff]
        %v428 = vld [vmem:[%s271 + $0x488] sm:$0xff]
        %v429 = vld [vmem:[%s271 + $0x490] sm:$0xff]
        %v430 = vld [vmem:[%s271 + $0x498] sm:$0xff]
        %v431 = vld [vmem:[%s271 + $0x4a0] sm:$0xff]
        %v432 = vld [vmem:[%s271 + $0x4a8] sm:$0xff]
        %v433 = vld [vmem:[%s271 + $0x4b0] sm:$0xff]
        %v434 = vld [vmem:[%s271 + $0x4b8] sm:$0xff]
        %v435 = vld [vmem:[%s271 + $0x4c0] sm:$0xff]
        %v436 = vld [vmem:[%s271 + $0x4c8] sm:$0xff]
        %v437 = vld [vmem:[%s271 + $0x4d0] sm:$0xff]
        %v438 = vld [vmem:[%s271 + $0x4d8] sm:$0xff]
        %v439 = vld [vmem:[%s271 + $0x4e0] sm:$0xff]
        %v440 = vld [vmem:[%s271 + $0x4e8] sm:$0xff]
        %v441 = vld [vmem:[%s271 + $0x4f0] sm:$0xff]
        %v442 = vld [vmem:[%s271 + $0x4f8] sm:$0xff]
        %v443 = vld [vmem:[%s271 + $0x500] sm:$0xff]
        %v444 = vld [vmem:[%s271 + $0x508] sm:$0xff]
        %v445 = vld [vmem:[%s271 + $0x510] sm:$0xff]
        %v446 = vld [vmem:[%s271 + $0x518] sm:$0xff]
        %v447 = vld [vmem:[%s271 + $0x520] sm:$0xff]
        %v448 = vld [vmem:[%s271 + $0x528] sm:$0xff]
        %v449 = vld [vmem:[%s271 + $0x530] sm:$0xff]
        %v450 = vld [vmem:[%s271 + $0x538] sm:$0xff]
        %v451 = vld [vmem:[%s271 + $0x540] sm:$0xff]
        %v452 = vld [vmem:[%s271 + $0x548] sm:$0xff]
        %v453 = vld [vmem:[%s271 + $0x550] sm:$0xff]
        %v454 = vld [vmem:[%s271 + $0x558] sm:$0xff]
        %v455 = vld [vmem:[%s271 + $0x560] sm:$0xff]
        %v456 = vld [vmem:[%s271 + $0x568] sm:$0xff]
        %v457 = vld [vmem:[%s271 + $0x570] sm:$0xff]
        %v458 = vld [vmem:[%s271 + $0x578] sm:$0xff]
        %v459 = vld [vmem:[%s271 + $0x580] sm:$0xff]
        %v460 = vld [vmem:[%s271 + $0x588] sm:$0xff]
        %v461 = vld [vmem:[%s271 + $0x590] sm:$0xff]
        %v462 = vld [vmem:[%s271 + $0x598] sm:$0xff]
        %v463 = vld [vmem:[%s271 + $0x5a0] sm:$0xff]
        %v464 = vld [vmem:[%s271 + $0x5a8] sm:$0xff]
        %v465 = vld [vmem:[%s271 + $0x5b0] sm:$0xff]
        %v466 = vld [vmem:[%s271 + $0x5b8] sm:$0xff]
        %v467 = vld [vmem:[%s271 + $0x5c0] sm:$0xff]
        %v468 = vld [vmem:[%s271 + $0x5c8] sm:$0xff]
        %v469 = vld [vmem:[%s271 + $0x5d0] sm:$0xff]
        %v470 = vld [vmem:[%s271 + $0x5d8] sm:$0xff]
        %v471 = vld [vmem:[%s271 + $0x5e0] sm:$0xff]
        %v472 = vld [vmem:[%s271 + $0x5e8] sm:$0xff]
        %v473 = vld [vmem:[%s271 + $0x5f0] sm:$0xff]
        %v474 = vld [vmem:[%s271 + $0x5f8] sm:$0xff]
        %v475 = vld [vmem:[%s271 + $0x600] sm:$0xff]
        %v476 = vld [vmem:[%s271 + $0x608] sm:$0xff]
        %v477 = vld [vmem:[%s271 + $0x610] sm:$0xff]
        %v478 = vld [vmem:[%s271 + $0x618] sm:$0xff]
        %v479 = vld [vmem:[%s271 + $0x620] sm:$0xff]
        %v480 = vld [vmem:[%s271 + $0x628] sm:$0xff]
        %v481 = vld [vmem:[%s271 + $0x630] sm:$0xff]
        %v482 = vld [vmem:[%s271 + $0x638] sm:$0xff]
        %v483 = vld [vmem:[%s271 + $0x640] sm:$0xff]
        %v484 = vld [vmem:[%s271 + $0x648] sm:$0xff]
        %v485 = vld [vmem:[%s271 + $0x650] sm:$0xff]
        %v486 = vld [vmem:[%s271 + $0x658] sm:$0xff]
        %v487 = vld [vmem:[%s271 + $0x660] sm:$0xff]
        %v488 = vld [vmem:[%s271 + $0x668] sm:$0xff]
        %v489 = vld [vmem:[%s271 + $0x670] sm:$0xff]
        %v490 = vld [vmem:[%s271 + $0x678] sm:$0xff]
        %v491 = vld [vmem:[%s271 + $0x680] sm:$0xff]
        %v492 = vld [vmem:[%s271 + $0x688] sm:$0xff]
        %v493 = vld [vmem:[%s271 + $0x690] sm:$0xff]
        %v494 = vld [vmem:[%s271 + $0x698] sm:$0xff]
        %v495 = vld [vmem:[%s271 + $0x6a0] sm:$0xff]
        %v496 = vld [vmem:[%s271 + $0x6a8] sm:$0xff]
        %v497 = vld [vmem:[%s271 + $0x6b0] sm:$0xff]
        %v498 = vld [vmem:[%s271 + $0x6b8] sm:$0xff]
        %v499 = vld [vmem:[%s271 + $0x6c0] sm:$0xff]
        %v500 = vld [vmem:[%s271 + $0x6c8] sm:$0xff]
        %v501 = vld [vmem:[%s271 + $0x6d0] sm:$0xff]
        %v502 = vld [vmem:[%s271 + $0x6d8] sm:$0xff]
        %v503 = vld [vmem:[%s271 + $0x6e0] sm:$0xff]
        %v504 = vld [vmem:[%s271 + $0x6e8] sm:$0xff]
        %v505 = vld [vmem:[%s271 + $0x6f0] sm:$0xff]
        %v506 = vld [vmem:[%s271 + $0x6f8] sm:$0xff]
        %v507 = vpack.c.bf16 %v290, %v283
        %v508 = vpack.c.bf16 %v291, %v284
        %v509 = vpack.c.bf16 %v292, %v285
        %v510 = vpack.c.bf16 %v293, %v286
        %v511 = vpack.c.bf16 %v294, %v287
        %v512 = vpack.c.bf16 %v295, %v288
        %v513 = vpack.c.bf16 %v296, %v289
        %v514 = vpack.c.bf16 %v304, %v297
        %v515 = vpack.c.bf16 %v305, %v298
        %v516 = vpack.c.bf16 %v306, %v299
        %v517 = vpack.c.bf16 %v307, %v300
        %v518 = vpack.c.bf16 %v308, %v301
        %v519 = vpack.c.bf16 %v309, %v302
        %v520 = vpack.c.bf16 %v310, %v303
        %v521 = vpack.c.bf16 %v318, %v311
        %v522 = vpack.c.bf16 %v319, %v312
        %v523 = vpack.c.bf16 %v320, %v313
        %v524 = vpack.c.bf16 %v321, %v314
        %v525 = vpack.c.bf16 %v322, %v315
        %v526 = vpack.c.bf16 %v323, %v316
        %v527 = vpack.c.bf16 %v324, %v317
        %v528 = vpack.c.bf16 %v332, %v325
        %v529 = vpack.c.bf16 %v333, %v326
        %v530 = vpack.c.bf16 %v334, %v327
        %v531 = vpack.c.bf16 %v335, %v328
        %v532 = vpack.c.bf16 %v336, %v329
        %v533 = vpack.c.bf16 %v337, %v330
        %v534 = vpack.c.bf16 %v338, %v331
        %v535 = vpack.c.bf16 %v346, %v339
        %v536 = vpack.c.bf16 %v347, %v340
        %v537 = vpack.c.bf16 %v348, %v341
        %v538 = vpack.c.bf16 %v349, %v342
        %v539 = vpack.c.bf16 %v350, %v343
        %v540 = vpack.c.bf16 %v351, %v344
        %v541 = vpack.c.bf16 %v352, %v345
        %v542 = vpack.c.bf16 %v360, %v353
        %v543 = vpack.c.bf16 %v361, %v354
        %v544 = vpack.c.bf16 %v362, %v355
        %v545 = vpack.c.bf16 %v363, %v356
        %v546 = vpack.c.bf16 %v364, %v357
        %v547 = vpack.c.bf16 %v365, %v358
        %v548 = vpack.c.bf16 %v366, %v359
        %v549 = vpack.c.bf16 %v374, %v367
        %v550 = vpack.c.bf16 %v375, %v368
        %v551 = vpack.c.bf16 %v376, %v369
        %v552 = vpack.c.bf16 %v377, %v370
        %v553 = vpack.c.bf16 %v378, %v371
        %v554 = vpack.c.bf16 %v379, %v372
        %v555 = vpack.c.bf16 %v380, %v373
        %v556 = vpack.c.bf16 %v388, %v381
        %v557 = vpack.c.bf16 %v389, %v382
        %v558 = vpack.c.bf16 %v390, %v383
        %v559 = vpack.c.bf16 %v391, %v384
        %v560 = vpack.c.bf16 %v392, %v385
        %v561 = vpack.c.bf16 %v393, %v386
        %v562 = vpack.c.bf16 %v394, %v387
        %v563 = vpack.c.bf16 %v402, %v395
        %v564 = vpack.c.bf16 %v403, %v396
        %v565 = vpack.c.bf16 %v404, %v397
        %v566 = vpack.c.bf16 %v405, %v398
        %v567 = vpack.c.bf16 %v406, %v399
        %v568 = vpack.c.bf16 %v407, %v400
        %v569 = vpack.c.bf16 %v408, %v401
        %v570 = vpack.c.bf16 %v416, %v409
        %v571 = vpack.c.bf16 %v417, %v410
        %v572 = vpack.c.bf16 %v418, %v411
        %v573 = vpack.c.bf16 %v419, %v412
        %v574 = vpack.c.bf16 %v420, %v413
        %v575 = vpack.c.bf16 %v421, %v414
        %v576 = vpack.c.bf16 %v422, %v415
        %v577 = vpack.c.bf16 %v430, %v423
        %v578 = vpack.c.bf16 %v431, %v424
        %v579 = vpack.c.bf16 %v432, %v425
        %v580 = vpack.c.bf16 %v433, %v426
        %v581 = vpack.c.bf16 %v434, %v427
        %v582 = vpack.c.bf16 %v435, %v428
        %v583 = vpack.c.bf16 %v436, %v429
        %v584 = vpack.c.bf16 %v444, %v437
        %v585 = vpack.c.bf16 %v445, %v438
        %v586 = vpack.c.bf16 %v446, %v439
        %v587 = vpack.c.bf16 %v447, %v440
        %v588 = vpack.c.bf16 %v448, %v441
        %v589 = vpack.c.bf16 %v449, %v442
        %v590 = vpack.c.bf16 %v450, %v443
        %v591 = vpack.c.bf16 %v458, %v451
        %v592 = vpack.c.bf16 %v459, %v452
        %v593 = vpack.c.bf16 %v460, %v453
        %v594 = vpack.c.bf16 %v461, %v454
        %v595 = vpack.c.bf16 %v462, %v455
        %v596 = vpack.c.bf16 %v463, %v456
        %v597 = vpack.c.bf16 %v464, %v457
        %v598 = vpack.c.bf16 %v472, %v465
        %v599 = vpack.c.bf16 %v473, %v466
        %v600 = vpack.c.bf16 %v474, %v467
        %v601 = vpack.c.bf16 %v475, %v468
        %v602 = vpack.c.bf16 %v476, %v469
        %v603 = vpack.c.bf16 %v477, %v470
        %v604 = vpack.c.bf16 %v478, %v471
        %v605 = vpack.c.bf16 %v486, %v479
        %v606 = vpack.c.bf16 %v487, %v480
        %v607 = vpack.c.bf16 %v488, %v481
        %v608 = vpack.c.bf16 %v489, %v482
        %v609 = vpack.c.bf16 %v490, %v483
        %v610 = vpack.c.bf16 %v491, %v484
        %v611 = vpack.c.bf16 %v492, %v485
        %v612 = vpack.c.bf16 %v500, %v493
        %v613 = vpack.c.bf16 %v501, %v494
        %v614 = vpack.c.bf16 %v502, %v495
        %v615 = vpack.c.bf16 %v503, %v496
        %v616 = vpack.c.bf16 %v504, %v497
        %v617 = vpack.c.bf16 %v505, %v498
        %v618 = vpack.c.bf16 %v506, %v499
        %v619 = vld [vmem:[%s277] sm:$0xff]
        %v620 = vld [vmem:[%s277 + $0x8] sm:$0xff]
        %v621 = vld [vmem:[%s277 + $0x10] sm:$0xff]
        %v622 = vld [vmem:[%s277 + $0x18] sm:$0xff]
        %v623 = vld [vmem:[%s277 + $0x20] sm:$0xff]
        %v624 = vld [vmem:[%s277 + $0x28] sm:$0xff]
        %v625 = vld [vmem:[%s277 + $0x30] sm:$0xff]
        %v626 = vld [vmem:[%s277 + $0x38] sm:$0xff]
        %v627 = vld [vmem:[%s277 + $0x40] sm:$0xff]
        %v628 = vld [vmem:[%s277 + $0x48] sm:$0xff]
        %v629 = vld [vmem:[%s277 + $0x50] sm:$0xff]
        %v630 = vld [vmem:[%s277 + $0x58] sm:$0xff]
        %v631 = vld [vmem:[%s277 + $0x60] sm:$0xff]
        %v632 = vld [vmem:[%s277 + $0x68] sm:$0xff]
        %v633 = vld [vmem:[%s277 + $0x70] sm:$0xff]
        %v634 = vld [vmem:[%s277 + $0x78] sm:$0xff]
        %v635 = vld [vmem:[%s277 + $0x80] sm:$0xff]
        %v636 = vld [vmem:[%s277 + $0x88] sm:$0xff]
        %v637 = vld [vmem:[%s277 + $0x90] sm:$0xff]
        %v638 = vld [vmem:[%s277 + $0x98] sm:$0xff]
        %v639 = vld [vmem:[%s277 + $0xa0] sm:$0xff]
        %v640 = vld [vmem:[%s277 + $0xa8] sm:$0xff]
        %v641 = vld [vmem:[%s277 + $0xb0] sm:$0xff]
        %v642 = vld [vmem:[%s277 + $0xb8] sm:$0xff]
        %v643 = vld [vmem:[%s277 + $0xc0] sm:$0xff]
        %v644 = vld [vmem:[%s277 + $0xc8] sm:$0xff]
        %v645 = vld [vmem:[%s277 + $0xd0] sm:$0xff]
        %v646 = vld [vmem:[%s277 + $0xd8] sm:$0xff]
        %v647 = vld [vmem:[%s277 + $0xe0] sm:$0xff]
        %v648 = vld [vmem:[%s277 + $0xe8] sm:$0xff]
        %v649 = vld [vmem:[%s277 + $0xf0] sm:$0xff]
        %v650 = vld [vmem:[%s277 + $0xf8] sm:$0xff]
        %v651 = vpack.c.bf16 %v620, %v619
        %v652 = vpack.c.bf16 %v622, %v621
        %v653 = vpack.c.bf16 %v624, %v623
        %v654 = vpack.c.bf16 %v626, %v625
        %v655 = vpack.c.bf16 %v628, %v627
        %v656 = vpack.c.bf16 %v630, %v629
        %v657 = vpack.c.bf16 %v632, %v631
        %v658 = vpack.c.bf16 %v634, %v633
        %v659 = vpack.c.bf16 %v636, %v635
        %v660 = vpack.c.bf16 %v638, %v637
        %v661 = vpack.c.bf16 %v640, %v639
        %v662 = vpack.c.bf16 %v642, %v641
        %v663 = vpack.c.bf16 %v644, %v643
        %v664 = vpack.c.bf16 %v646, %v645
        %v665 = vpack.c.bf16 %v648, %v647
        %v666 = vpack.c.bf16 %v650, %v649
        %v667 = vld [vmem:[%s2] sm:$0xff]
        %v668 = vld [vmem:[%s2 + $0x8] sm:$0xff]
        %v669 = vld [vmem:[%s2 + $0x10] sm:$0xff]
        %v670 = vld [vmem:[%s2 + $0x18] sm:$0xff]
        %v671 = vld [vmem:[%s2 + $0x20] sm:$0xff]
        %v672 = vld [vmem:[%s2 + $0x28] sm:$0xff]
        %v673 = vld [vmem:[%s2 + $0x30] sm:$0xff]
        %v674 = vld [vmem:[%s2 + $0x38] sm:$0xff]
        %v675 = vld [vmem:[%s2 + $0x40] sm:$0xff]
        %v676 = vld [vmem:[%s2 + $0x48] sm:$0xff]
        %v677 = vld [vmem:[%s2 + $0x50] sm:$0xff]
        %v678 = vld [vmem:[%s2 + $0x58] sm:$0xff]
        %v679 = vld [vmem:[%s2 + $0x60] sm:$0xff]
        %v680 = vld [vmem:[%s2 + $0x68] sm:$0xff]
        %v681 = vld [vmem:[%s2 + $0x70] sm:$0xff]
        %v682 = vld [vmem:[%s2 + $0x78] sm:$0xff]
        %v683 = vld [vmem:[%s2 + $0x80] sm:$0xff]
        %v684 = vld [vmem:[%s2 + $0x88] sm:$0xff]
        %v685 = vld [vmem:[%s2 + $0x90] sm:$0xff]
        %v686 = vld [vmem:[%s2 + $0x98] sm:$0xff]
        %v687 = vld [vmem:[%s2 + $0xa0] sm:$0xff]
        %v688 = vld [vmem:[%s2 + $0xa8] sm:$0xff]
        %v689 = vld [vmem:[%s2 + $0xb0] sm:$0xff]
        %v690 = vld [vmem:[%s2 + $0xb8] sm:$0xff]
        %v691 = vld [vmem:[%s2 + $0xc0] sm:$0xff]
        %v692 = vld [vmem:[%s2 + $0xc8] sm:$0xff]
        %v693 = vld [vmem:[%s2 + $0xd0] sm:$0xff]
        %v694 = vld [vmem:[%s2 + $0xd8] sm:$0xff]
        %v695 = vld [vmem:[%s2 + $0xe0] sm:$0xff]
        %v696 = vld [vmem:[%s2 + $0xe8] sm:$0xff]
        %v697 = vld [vmem:[%s2 + $0xf0] sm:$0xff]
        %v698 = vld [vmem:[%s2 + $0xf8] sm:$0xff]
        %v699 = vld [vmem:[%s2 + $0x100] sm:$0xff]
        %v700 = vld [vmem:[%s2 + $0x108] sm:$0xff]
        %v701 = vld [vmem:[%s2 + $0x110] sm:$0xff]
        %v702 = vld [vmem:[%s2 + $0x118] sm:$0xff]
        %v703 = vld [vmem:[%s2 + $0x120] sm:$0xff]
        %v704 = vld [vmem:[%s2 + $0x128] sm:$0xff]
        %v705 = vld [vmem:[%s2 + $0x130] sm:$0xff]
        %v706 = vld [vmem:[%s2 + $0x138] sm:$0xff]
        %v707 = vld [vmem:[%s2 + $0x140] sm:$0xff]
        %v708 = vld [vmem:[%s2 + $0x148] sm:$0xff]
        %v709 = vld [vmem:[%s2 + $0x150] sm:$0xff]
        %v710 = vld [vmem:[%s2 + $0x158] sm:$0xff]
        %v711 = vld [vmem:[%s2 + $0x160] sm:$0xff]
        %v712 = vld [vmem:[%s2 + $0x168] sm:$0xff]
        %v713 = vld [vmem:[%s2 + $0x170] sm:$0xff]
        %v714 = vld [vmem:[%s2 + $0x178] sm:$0xff]
        %v715 = vld [vmem:[%s2 + $0x180] sm:$0xff]
        %v716 = vld [vmem:[%s2 + $0x188] sm:$0xff]
        %v717 = vld [vmem:[%s2 + $0x190] sm:$0xff]
        %v718 = vld [vmem:[%s2 + $0x198] sm:$0xff]
        %v719 = vld [vmem:[%s2 + $0x1a0] sm:$0xff]
        %v720 = vld [vmem:[%s2 + $0x1a8] sm:$0xff]
        %v721 = vld [vmem:[%s2 + $0x1b0] sm:$0xff]
        %v722 = vld [vmem:[%s2 + $0x1b8] sm:$0xff]
        %v723 = vld [vmem:[%s2 + $0x1c0] sm:$0xff]
        %v724 = vld [vmem:[%s2 + $0x1c8] sm:$0xff]
        %v725 = vld [vmem:[%s2 + $0x1d0] sm:$0xff]
        %v726 = vld [vmem:[%s2 + $0x1d8] sm:$0xff]
        %v727 = vld [vmem:[%s2 + $0x1e0] sm:$0xff]
        %v728 = vld [vmem:[%s2 + $0x1e8] sm:$0xff]
        %v729 = vld [vmem:[%s2 + $0x1f0] sm:$0xff]
        %v730 = vld [vmem:[%s2 + $0x1f8] sm:$0xff]
        %v731 = vld [vmem:[%s2 + $0x200] sm:$0xff]
        %v732 = vld [vmem:[%s2 + $0x208] sm:$0xff]
        %v733 = vld [vmem:[%s2 + $0x210] sm:$0xff]
        %v734 = vld [vmem:[%s2 + $0x218] sm:$0xff]
        %v735 = vld [vmem:[%s2 + $0x220] sm:$0xff]
        %v736 = vld [vmem:[%s2 + $0x228] sm:$0xff]
        %v737 = vld [vmem:[%s2 + $0x230] sm:$0xff]
        %v738 = vld [vmem:[%s2 + $0x238] sm:$0xff]
        %v739 = vld [vmem:[%s2 + $0x240] sm:$0xff]
        %v740 = vld [vmem:[%s2 + $0x248] sm:$0xff]
        %v741 = vld [vmem:[%s2 + $0x250] sm:$0xff]
        %v742 = vld [vmem:[%s2 + $0x258] sm:$0xff]
        %v743 = vld [vmem:[%s2 + $0x260] sm:$0xff]
        %v744 = vld [vmem:[%s2 + $0x268] sm:$0xff]
        %v745 = vld [vmem:[%s2 + $0x270] sm:$0xff]
        %v746 = vld [vmem:[%s2 + $0x278] sm:$0xff]
        %v747 = vld [vmem:[%s2 + $0x280] sm:$0xff]
        %v748 = vld [vmem:[%s2 + $0x288] sm:$0xff]
        %v749 = vld [vmem:[%s2 + $0x290] sm:$0xff]
        %v750 = vld [vmem:[%s2 + $0x298] sm:$0xff]
        %v751 = vld [vmem:[%s2 + $0x2a0] sm:$0xff]
        %v752 = vld [vmem:[%s2 + $0x2a8] sm:$0xff]
        %v753 = vld [vmem:[%s2 + $0x2b0] sm:$0xff]
        %v754 = vld [vmem:[%s2 + $0x2b8] sm:$0xff]
        %v755 = vld [vmem:[%s2 + $0x2c0] sm:$0xff]
        %v756 = vld [vmem:[%s2 + $0x2c8] sm:$0xff]
        %v757 = vld [vmem:[%s2 + $0x2d0] sm:$0xff]
        %v758 = vld [vmem:[%s2 + $0x2d8] sm:$0xff]
        %v759 = vld [vmem:[%s2 + $0x2e0] sm:$0xff]
        %v760 = vld [vmem:[%s2 + $0x2e8] sm:$0xff]
        %v761 = vld [vmem:[%s2 + $0x2f0] sm:$0xff]
        %v762 = vld [vmem:[%s2 + $0x2f8] sm:$0xff]
        %v763 = vld [vmem:[%s2 + $0x300] sm:$0xff]
        %v764 = vld [vmem:[%s2 + $0x308] sm:$0xff]
        %v765 = vld [vmem:[%s3] sm:$0xff]
        %v766 = vld [vmem:[%s3 + $0x8] sm:$0x11]
        %v769 = vunpack.c.l.b16 %v765
        %v770 = vunpack.c.h.b16 %v765
        %v771 = vunpack.c.l.b16 %v766
        %v772 = vunpack.c.h.b16 %v766
        %v773 = vpack.c.b16 %v771, %v769
        %v774 = vpack.c.b16 %v772, %v770
        %vm775 = vcmask 80896
        %v777 = vsel %vm775, %v651, 0
        %v780 = vsel %vm775, %v652, 0
        %v783 = vsel %vm775, %v653, 0
        %v786 = vsel %vm775, %v654, 0
        %v789 = vsel %vm775, %v655, 0
        %v792 = vsel %vm775, %v656, 0
        %v795 = vsel %vm775, %v657, 0
        %v798 = vsel %vm775, %v658, 0
        %v801 = vsel %vm775, %v659, 0
        %v804 = vsel %vm775, %v660, 0
        %v807 = vsel %vm775, %v661, 0
        %v810 = vsel %vm775, %v662, 0
        %v813 = vsel %vm775, %v663, 0
        %v816 = vsel %vm775, %v664, 0
        %v819 = vsel %vm775, %v665, 0
        %v822 = vsel %vm775, %v666, 0
        %vm824 = vcmask 1044480
        %v826 = vsel %vm824, %v773, 0
        %v829 = vsel %vm824, %v774, 0
        %831 = vmatprep.subr.bf16.mxu0 %v829
        %832 = vmatpush1.bf16.msra.mxu0 %v826
        %833 = vmatprep.subr.bf16.mxu0 0
        %834 = vmatpush1.bf16.msra.mxu0 0
        %835 = vmatprep.subr.bf16.mxu0 0
        %836 = vmatpush1.bf16.msra.mxu0 0
        %837 = vmatprep.subr.bf16.mxu0 0
        %838 = vmatpush1.bf16.msra.mxu0 0
        %839 = vmatprep.subr.bf16.mxu0 0
        %840 = vmatpush1.bf16.msra.mxu0 0
        %841 = vmatprep.subr.bf16.mxu0 0
        %842 = vmatpush1.bf16.msra.mxu0 0
        %843 = vmatprep.subr.bf16.mxu0 0
        %844 = vmatpush1.bf16.msra.mxu0 0
        %845 = vmatprep.subr.bf16.mxu0 0
        %846 = vmatpush1.bf16.msra.mxu0 0
        %847 = vmatprep.subr.bf16.mxu0 0
        %848 = vmatpush1.bf16.msra.mxu0 0
        %849 = vmatprep.subr.bf16.mxu0 0
        %850 = vmatpush1.bf16.msra.mxu0 0
        %851 = vmatprep.subr.bf16.mxu0 0
        %852 = vmatpush1.bf16.msra.mxu0 0
        %853 = vmatprep.subr.bf16.mxu0 0
        %854 = vmatpush1.bf16.msra.mxu0 0
        %855 = vmatprep.subr.bf16.mxu0 0
        %856 = vmatpush1.bf16.msra.mxu0 0
        %857 = vmatprep.subr.bf16.mxu0 0
        %858 = vmatpush1.bf16.msra.mxu0 0
        %859 = vmatprep.subr.bf16.mxu0 0
        %860 = vmatpush1.bf16.msra.mxu0 0
        %861 = vmatprep.subr.bf16.mxu0 0
        %862 = vmatpush1.bf16.msra.mxu0 0
        %863 = vmatprep.mubr.bf16.mxu0 0
        %864 = vmatmul.mubr.bf16.gmra.mrb[0].mxu0 %v777
        %v865 = vpop.f32.mrb[0].mxu0
        %v866 = vadd.f32 0.0, %v865
        %v867 = vpop.f32.mrb[0].mxu0
        %v868 = vadd.f32 0.0, %v867
        %v869 = vpop.f32.mrb[0].mxu0
        %v870 = vadd.f32 0.0, %v869
        %v871 = vpop.f32.mrb[0].mxu0
        %v872 = vadd.f32 0.0, %v871
        %873 = vmatprep.mubr.bf16.mxu0 0
        %874 = vmatmul.mubr.bf16.gmra.mrb[0].mxu0 %v780
        %v875 = vpop.f32.mrb[0].mxu0
        %v876 = vadd.f32 0.0, %v875
        %v877 = vpop.f32.mrb[0].mxu0
        %v878 = vadd.f32 0.0, %v877
        %v879 = vpop.f32.mrb[0].mxu0
        %v880 = vadd.f32 0.0, %v879
        %v881 = vpop.f32.mrb[0].mxu0
        %v882 = vadd.f32 0.0, %v881
        %883 = vmatprep.mubr.bf16.mxu0 0
        %884 = vmatmul.mubr.bf16.gmra.mrb[0].mxu0 %v783
        %v885 = vpop.f32.mrb[0].mxu0
        %v886 = vadd.f32 0.0, %v885
        %v887 = vpop.f32.mrb[0].mxu0
        %v888 = vadd.f32 0.0, %v887
        %v889 = vpop.f32.mrb[0].mxu0
        %v890 = vadd.f32 0.0, %v889
        %v891 = vpop.f32.mrb[0].mxu0
        %v892 = vadd.f32 0.0, %v891
        %893 = vmatprep.mubr.bf16.mxu0 0
        %894 = vmatmul.mubr.bf16.gmra.mrb[0].mxu0 %v786
        %v895 = vpop.f32.mrb[0].mxu0
        %v896 = vadd.f32 0.0, %v895
        %v897 = vpop.f32.mrb[0].mxu0
        %v898 = vadd.f32 0.0, %v897
        %v899 = vpop.f32.mrb[0].mxu0
        %v900 = vadd.f32 0.0, %v899
        %v901 = vpop.f32.mrb[0].mxu0
        %v902 = vadd.f32 0.0, %v901
        %903 = vmatprep.mubr.bf16.mxu0 0
        %904 = vmatmul.mubr.bf16.gmra.mrb[0].mxu0 %v789
        %v905 = vpop.f32.mrb[0].mxu0
        %v906 = vadd.f32 0.0, %v905
        %v907 = vpop.f32.mrb[0].mxu0
        %v908 = vadd.f32 0.0, %v907
        %v909 = vpop.f32.mrb[0].mxu0
        %v910 = vadd.f32 0.0, %v909
        %v911 = vpop.f32.mrb[0].mxu0
        %v912 = vadd.f32 0.0, %v911
        %913 = vmatprep.mubr.bf16.mxu0 0
        %914 = vmatmul.mubr.bf16.gmra.mrb[0].mxu0 %v792
        %v915 = vpop.f32.mrb[0].mxu0
        %v916 = vadd.f32 0.0, %v915
        %v917 = vpop.f32.mrb[0].mxu0
        %v918 = vadd.f32 0.0, %v917
        %v919 = vpop.f32.mrb[0].mxu0
        %v920 = vadd.f32 0.0, %v919
        %v921 = vpop.f32.mrb[0].mxu0
        %v922 = vadd.f32 0.0, %v921
        %923 = vmatprep.mubr.bf16.mxu0 0
        %924 = vmatmul.mubr.bf16.gmra.mrb[0].mxu0 %v795
        %v925 = vpop.f32.mrb[0].mxu0
        %v926 = vadd.f32 0.0, %v925
        %v927 = vpop.f32.mrb[0].mxu0
        %v928 = vadd.f32 0.0, %v927
        %v929 = vpop.f32.mrb[0].mxu0
        %v930 = vadd.f32 0.0, %v929
        %v931 = vpop.f32.mrb[0].mxu0
        %v932 = vadd.f32 0.0, %v931
        %933 = vmatprep.mubr.bf16.mxu0 0
        %934 = vmatmul.mubr.bf16.gmra.mrb[0].mxu0 %v798
        %v935 = vpop.f32.mrb[0].mxu0
        %v936 = vadd.f32 0.0, %v935
        %v937 = vpop.f32.mrb[0].mxu0
        %v938 = vadd.f32 0.0, %v937
        %v939 = vpop.f32.mrb[0].mxu0
        %v940 = vadd.f32 0.0, %v939
        %v941 = vpop.f32.mrb[0].mxu0
        %v942 = vadd.f32 0.0, %v941
        %943 = vmatprep.mubr.bf16.mxu0 0
        %944 = vmatmul.mubr.bf16.gmra.mrb[0].mxu0 %v801
        %v945 = vpop.f32.mrb[0].mxu0
        %v946 = vadd.f32 0.0, %v945
        %v947 = vpop.f32.mrb[0].mxu0
        %v948 = vadd.f32 0.0, %v947
        %v949 = vpop.f32.mrb[0].mxu0
        %v950 = vadd.f32 0.0, %v949
        %v951 = vpop.f32.mrb[0].mxu0
        %v952 = vadd.f32 0.0, %v951
        %953 = vmatprep.mubr.bf16.mxu0 0
        %954 = vmatmul.mubr.bf16.gmra.mrb[0].mxu0 %v804
        %v955 = vpop.f32.mrb[0].mxu0
        %v956 = vadd.f32 0.0, %v955
        %v957 = vpop.f32.mrb[0].mxu0
        %v958 = vadd.f32 0.0, %v957
        %v959 = vpop.f32.mrb[0].mxu0
        %v960 = vadd.f32 0.0, %v959
        %v961 = vpop.f32.mrb[0].mxu0
        %v962 = vadd.f32 0.0, %v961
        %963 = vmatprep.mubr.bf16.mxu0 0
        %964 = vmatmul.mubr.bf16.gmra.mrb[0].mxu0 %v807
        %v965 = vpop.f32.mrb[0].mxu0
        %v966 = vadd.f32 0.0, %v965
        %v967 = vpop.f32.mrb[0].mxu0
        %v968 = vadd.f32 0.0, %v967
        %v969 = vpop.f32.mrb[0].mxu0
        %v970 = vadd.f32 0.0, %v969
        %v971 = vpop.f32.mrb[0].mxu0
        %v972 = vadd.f32 0.0, %v971
        %973 = vmatprep.mubr.bf16.mxu0 0
        %974 = vmatmul.mubr.bf16.gmra.mrb[0].mxu0 %v810
        %v975 = vpop.f32.mrb[0].mxu0
        %v976 = vadd.f32 0.0, %v975
        %v977 = vpop.f32.mrb[0].mxu0
        %v978 = vadd.f32 0.0, %v977
        %v979 = vpop.f32.mrb[0].mxu0
        %v980 = vadd.f32 0.0, %v979
        %v981 = vpop.f32.mrb[0].mxu0
        %v982 = vadd.f32 0.0, %v981
        %983 = vmatprep.mubr.bf16.mxu0 0
        %984 = vmatmul.mubr.bf16.gmra.mrb[0].mxu0 %v813
        %v985 = vpop.f32.mrb[0].mxu0
        %v986 = vadd.f32 0.0, %v985
        %v987 = vpop.f32.mrb[0].mxu0
        %v988 = vadd.f32 0.0, %v987
        %v989 = vpop.f32.mrb[0].mxu0
        %v990 = vadd.f32 0.0, %v989
        %v991 = vpop.f32.mrb[0].mxu0
        %v992 = vadd.f32 0.0, %v991
        %993 = vmatprep.mubr.bf16.mxu0 0
        %994 = vmatmul.mubr.bf16.gmra.mrb[0].mxu0 %v816
        %v995 = vpop.f32.mrb[0].mxu0
        %v996 = vadd.f32 0.0, %v995
        %v997 = vpop.f32.mrb[0].mxu0
        %v998 = vadd.f32 0.0, %v997
        %v999 = vpop.f32.mrb[0].mxu0
        %v1000 = vadd.f32 0.0, %v999
        %v1001 = vpop.f32.mrb[0].mxu0
        %v1002 = vadd.f32 0.0, %v1001
        %1003 = vmatprep.mubr.bf16.mxu0 0
        %1004 = vmatmul.mubr.bf16.gmra.mrb[0].mxu0 %v819
        %v1005 = vpop.f32.mrb[0].mxu0
        %v1006 = vadd.f32 0.0, %v1005
        %v1007 = vpop.f32.mrb[0].mxu0
        %v1008 = vadd.f32 0.0, %v1007
        %v1009 = vpop.f32.mrb[0].mxu0
        %v1010 = vadd.f32 0.0, %v1009
        %v1011 = vpop.f32.mrb[0].mxu0
        %v1012 = vadd.f32 0.0, %v1011
        %1013 = vmatprep.mubr.bf16.mxu0 0
        %1014 = vmatmul.mubr.bf16.gmra.mrb[0].mxu0 %v822
        %v1015 = vpop.f32.mrb[0].mxu0
        %v1016 = vadd.f32 0.0, %v1015
        %v1017 = vpop.f32.mrb[0].mxu0
        %v1018 = vadd.f32 0.0, %v1017
        %v1019 = vpop.f32.mrb[0].mxu0
        %v1020 = vadd.f32 0.0, %v1019
        %v1021 = vpop.f32.mrb[0].mxu0
        %v1022 = vadd.f32 0.0, %v1021
        %1023 = vdwg.mxu0
        %v1122 = vunpack.c.l.b16 %v667
        %v1123 = vunpack.c.h.b16 %v667
        %v1124 = vunpack.c.l.b16 %v668
        %v1125 = vunpack.c.h.b16 %v668
        %v1126 = vunpack.c.l.b16 %v669
        %v1127 = vunpack.c.h.b16 %v669
        %v1128 = vunpack.c.l.b16 %v670
        %v1129 = vunpack.c.h.b16 %v670
        %v1130 = vunpack.c.l.b16 %v671
        %v1131 = vunpack.c.h.b16 %v671
        %v1132 = vunpack.c.l.b16 %v672
        %v1133 = vunpack.c.h.b16 %v672
        %v1134 = vunpack.c.l.b16 %v673
        %v1135 = vunpack.c.h.b16 %v673
        %v1136 = vunpack.c.l.b16 %v674
        %v1137 = vunpack.c.h.b16 %v674
        %v1138 = vunpack.c.l.b16 %v675
        %v1139 = vunpack.c.h.b16 %v675
        %v1140 = vunpack.c.l.b16 %v676
        %v1141 = vunpack.c.h.b16 %v676
        %v1142 = vunpack.c.l.b16 %v677
        %v1143 = vunpack.c.h.b16 %v677
        %v1144 = vunpack.c.l.b16 %v678
        %v1145 = vunpack.c.h.b16 %v678
        %v1146 = vunpack.c.l.b16 %v679
        %v1147 = vunpack.c.h.b16 %v679
        %v1148 = vunpack.c.l.b16 %v680
        %v1149 = vunpack.c.h.b16 %v680
        %v1150 = vunpack.c.l.b16 %v681
        %v1151 = vunpack.c.h.b16 %v681
        %v1152 = vunpack.c.l.b16 %v682
        %v1153 = vunpack.c.h.b16 %v682
        %v1154 = vunpack.c.l.b16 %v683
        %v1155 = vunpack.c.h.b16 %v683
        %v1156 = vunpack.c.l.b16 %v684
        %v1157 = vunpack.c.h.b16 %v684
        %v1158 = vunpack.c.l.b16 %v685
        %v1159 = vunpack.c.h.b16 %v685
        %v1160 = vunpack.c.l.b16 %v686
        %v1161 = vunpack.c.h.b16 %v686
        %v1162 = vunpack.c.l.b16 %v687
        %v1163 = vunpack.c.h.b16 %v687
        %v1164 = vunpack.c.l.b16 %v688
        %v1165 = vunpack.c.h.b16 %v688
        %v1166 = vunpack.c.l.b16 %v689
        %v1167 = vunpack.c.h.b16 %v689
        %v1168 = vunpack.c.l.b16 %v690
        %v1169 = vunpack.c.h.b16 %v690
        %v1170 = vunpack.c.l.b16 %v691
        %v1171 = vunpack.c.h.b16 %v691
        %v1172 = vunpack.c.l.b16 %v692
        %v1173 = vunpack.c.h.b16 %v692
        %v1174 = vunpack.c.l.b16 %v693
        %v1175 = vunpack.c.h.b16 %v693
        %v1176 = vunpack.c.l.b16 %v694
        %v1177 = vunpack.c.h.b16 %v694
        %v1178 = vunpack.c.l.b16 %v695
        %v1179 = vunpack.c.h.b16 %v695
        %v1180 = vunpack.c.l.b16 %v696
        %v1181 = vunpack.c.h.b16 %v696
        %v1182 = vunpack.c.l.b16 %v697
        %v1183 = vunpack.c.h.b16 %v697
        %v1184 = vunpack.c.l.b16 %v698
        %v1185 = vunpack.c.h.b16 %v698
        %v1186 = vunpack.c.l.b16 %v699
        %v1187 = vunpack.c.h.b16 %v699
        %v1188 = vunpack.c.l.b16 %v700
        %v1189 = vunpack.c.h.b16 %v700
        %v1190 = vunpack.c.l.b16 %v701
        %v1191 = vunpack.c.h.b16 %v701
        %v1192 = vunpack.c.l.b16 %v702
        %v1193 = vunpack.c.h.b16 %v702
        %v1194 = vunpack.c.l.b16 %v703
        %v1195 = vunpack.c.h.b16 %v703
        %v1196 = vunpack.c.l.b16 %v704
        %v1197 = vunpack.c.h.b16 %v704
        %v1198 = vunpack.c.l.b16 %v705
        %v1199 = vunpack.c.h.b16 %v705
        %v1200 = vunpack.c.l.b16 %v706
        %v1201 = vunpack.c.h.b16 %v706
        %v1202 = vunpack.c.l.b16 %v707
        %v1203 = vunpack.c.h.b16 %v707
        %v1204 = vunpack.c.l.b16 %v708
        %v1205 = vunpack.c.h.b16 %v708
        %v1206 = vunpack.c.l.b16 %v709
        %v1207 = vunpack.c.h.b16 %v709
        %v1208 = vunpack.c.l.b16 %v710
        %v1209 = vunpack.c.h.b16 %v710
        %v1210 = vunpack.c.l.b16 %v711
        %v1211 = vunpack.c.h.b16 %v711
        %v1212 = vunpack.c.l.b16 %v712
        %v1213 = vunpack.c.h.b16 %v712
        %v1214 = vunpack.c.l.b16 %v713
        %v1215 = vunpack.c.h.b16 %v713
        %v1216 = vunpack.c.l.b16 %v714
        %v1217 = vunpack.c.h.b16 %v714
        %v1218 = vunpack.c.l.b16 %v715
        %v1219 = vunpack.c.h.b16 %v715
        %v1220 = vunpack.c.l.b16 %v716
        %v1221 = vunpack.c.h.b16 %v716
        %v1222 = vunpack.c.l.b16 %v717
        %v1223 = vunpack.c.h.b16 %v717
        %v1224 = vunpack.c.l.b16 %v718
        %v1225 = vunpack.c.h.b16 %v718
        %v1226 = vunpack.c.l.b16 %v719
        %v1227 = vunpack.c.h.b16 %v719
        %v1228 = vunpack.c.l.b16 %v720
        %v1229 = vunpack.c.h.b16 %v720
        %v1230 = vunpack.c.l.b16 %v721
        %v1231 = vunpack.c.h.b16 %v721
        %v1232 = vunpack.c.l.b16 %v722
        %v1233 = vunpack.c.h.b16 %v722
        %v1234 = vunpack.c.l.b16 %v723
        %v1235 = vunpack.c.h.b16 %v723
        %v1236 = vunpack.c.l.b16 %v724
        %v1237 = vunpack.c.h.b16 %v724
        %v1238 = vunpack.c.l.b16 %v725
        %v1239 = vunpack.c.h.b16 %v725
        %v1240 = vunpack.c.l.b16 %v726
        %v1241 = vunpack.c.h.b16 %v726
        %v1242 = vunpack.c.l.b16 %v727
        %v1243 = vunpack.c.h.b16 %v727
        %v1244 = vunpack.c.l.b16 %v728
        %v1245 = vunpack.c.h.b16 %v728
        %v1246 = vunpack.c.l.b16 %v729
        %v1247 = vunpack.c.h.b16 %v729
        %v1248 = vunpack.c.l.b16 %v730
        %v1249 = vunpack.c.h.b16 %v730
        %v1250 = vunpack.c.l.b16 %v731
        %v1251 = vunpack.c.h.b16 %v731
        %v1252 = vunpack.c.l.b16 %v732
        %v1253 = vunpack.c.h.b16 %v732
        %v1254 = vunpack.c.l.b16 %v733
        %v1255 = vunpack.c.h.b16 %v733
        %v1256 = vunpack.c.l.b16 %v734
        %v1257 = vunpack.c.h.b16 %v734
        %v1258 = vunpack.c.l.b16 %v735
        %v1259 = vunpack.c.h.b16 %v735
        %v1260 = vunpack.c.l.b16 %v736
        %v1261 = vunpack.c.h.b16 %v736
        %v1262 = vunpack.c.l.b16 %v737
        %v1263 = vunpack.c.h.b16 %v737
        %v1264 = vunpack.c.l.b16 %v738
        %v1265 = vunpack.c.h.b16 %v738
        %v1266 = vunpack.c.l.b16 %v739
        %v1267 = vunpack.c.h.b16 %v739
        %v1268 = vunpack.c.l.b16 %v740
        %v1269 = vunpack.c.h.b16 %v740
        %v1270 = vunpack.c.l.b16 %v741
        %v1271 = vunpack.c.h.b16 %v741
        %v1272 = vunpack.c.l.b16 %v742
        %v1273 = vunpack.c.h.b16 %v742
        %v1274 = vunpack.c.l.b16 %v743
        %v1275 = vunpack.c.h.b16 %v743
        %v1276 = vunpack.c.l.b16 %v744
        %v1277 = vunpack.c.h.b16 %v744
        %v1278 = vunpack.c.l.b16 %v745
        %v1279 = vunpack.c.h.b16 %v745
        %v1280 = vunpack.c.l.b16 %v746
        %v1281 = vunpack.c.h.b16 %v746
        %v1282 = vunpack.c.l.b16 %v747
        %v1283 = vunpack.c.h.b16 %v747
        %v1284 = vunpack.c.l.b16 %v748
        %v1285 = vunpack.c.h.b16 %v748
        %v1286 = vunpack.c.l.b16 %v749
        %v1287 = vunpack.c.h.b16 %v749
        %v1288 = vunpack.c.l.b16 %v750
        %v1289 = vunpack.c.h.b16 %v750
        %v1290 = vunpack.c.l.b16 %v751
        %v1291 = vunpack.c.h.b16 %v751
        %v1292 = vunpack.c.l.b16 %v752
        %v1293 = vunpack.c.h.b16 %v752
        %v1294 = vunpack.c.l.b16 %v753
        %v1295 = vunpack.c.h.b16 %v753
        %v1296 = vunpack.c.l.b16 %v754
        %v1297 = vunpack.c.h.b16 %v754
        %v1298 = vunpack.c.l.b16 %v755
        %v1299 = vunpack.c.h.b16 %v755
        %v1300 = vunpack.c.l.b16 %v756
        %v1301 = vunpack.c.h.b16 %v756
        %v1302 = vunpack.c.l.b16 %v757
        %v1303 = vunpack.c.h.b16 %v757
        %v1304 = vunpack.c.l.b16 %v758
        %v1305 = vunpack.c.h.b16 %v758
        %v1306 = vunpack.c.l.b16 %v759
        %v1307 = vunpack.c.h.b16 %v759
        %v1308 = vunpack.c.l.b16 %v760
        %v1309 = vunpack.c.h.b16 %v760
        %v1310 = vunpack.c.l.b16 %v761
        %v1311 = vunpack.c.h.b16 %v761
        %v1312 = vunpack.c.l.b16 %v762
        %v1313 = vunpack.c.h.b16 %v762
        %v1314 = vunpack.c.l.b16 %v763
        %v1315 = vunpack.c.h.b16 %v763
        %v1316 = vunpack.c.l.b16 %v764
        %v1317 = vunpack.c.h.b16 %v764
        %v1318 = vpack.c.b16 %v1124, %v1122
        %v1319 = vpack.c.b16 %v1125, %v1123
        %v1320 = vpack.c.b16 %v1128, %v1126
        %v1321 = vpack.c.b16 %v1129, %v1127
        %v1322 = vpack.c.b16 %v1132, %v1130
        %v1323 = vpack.c.b16 %v1133, %v1131
        %v1324 = vpack.c.b16 %v1136, %v1134
        %v1325 = vpack.c.b16 %v1137, %v1135
        %v1326 = vpack.c.b16 %v1140, %v1138
        %v1327 = vpack.c.b16 %v1141, %v1139
        %v1328 = vpack.c.b16 %v1144, %v1142
        %v1329 = vpack.c.b16 %v1145, %v1143
        %v1330 = vpack.c.b16 %v1148, %v1146
        %v1331 = vpack.c.b16 %v1149, %v1147
        %v1332 = vpack.c.b16 %v1152, %v1150
        %v1333 = vpack.c.b16 %v1153, %v1151
        %v1334 = vpack.c.b16 %v1156, %v1154
        %v1335 = vpack.c.b16 %v1157, %v1155
        %v1336 = vpack.c.b16 %v1160, %v1158
        %v1337 = vpack.c.b16 %v1161, %v1159
        %v1338 = vpack.c.b16 %v1164, %v1162
        %v1339 = vpack.c.b16 %v1165, %v1163
        %v1340 = vpack.c.b16 %v1168, %v1166
        %v1341 = vpack.c.b16 %v1169, %v1167
        %v1342 = vpack.c.b16 %v1172, %v1170
        %v1343 = vpack.c.b16 %v1173, %v1171
        %v1344 = vpack.c.b16 %v1176, %v1174
        %v1345 = vpack.c.b16 %v1177, %v1175
        %v1346 = vpack.c.b16 %v1180, %v1178
        %v1347 = vpack.c.b16 %v1181, %v1179
        %v1348 = vpack.c.b16 %v1184, %v1182
        %v1349 = vpack.c.b16 %v1185, %v1183
        %v1350 = vpack.c.b16 %v1188, %v1186
        %v1351 = vpack.c.b16 %v1189, %v1187
        %v1352 = vpack.c.b16 %v1192, %v1190
        %v1353 = vpack.c.b16 %v1193, %v1191
        %v1354 = vpack.c.b16 %v1196, %v1194
        %v1355 = vpack.c.b16 %v1197, %v1195
        %v1356 = vpack.c.b16 %v1200, %v1198
        %v1357 = vpack.c.b16 %v1201, %v1199
        %v1358 = vpack.c.b16 %v1204, %v1202
        %v1359 = vpack.c.b16 %v1205, %v1203
        %v1360 = vpack.c.b16 %v1208, %v1206
        %v1361 = vpack.c.b16 %v1209, %v1207
        %v1362 = vpack.c.b16 %v1212, %v1210
        %v1363 = vpack.c.b16 %v1213, %v1211
        %v1364 = vpack.c.b16 %v1216, %v1214
        %v1365 = vpack.c.b16 %v1217, %v1215
        %v1366 = vpack.c.b16 %v1220, %v1218
        %v1367 = vpack.c.b16 %v1221, %v1219
        %v1368 = vpack.c.b16 %v1224, %v1222
        %v1369 = vpack.c.b16 %v1225, %v1223
        %v1370 = vpack.c.b16 %v1228, %v1226
        %v1371 = vpack.c.b16 %v1229, %v1227
        %v1372 = vpack.c.b16 %v1232, %v1230
        %v1373 = vpack.c.b16 %v1233, %v1231
        %v1374 = vpack.c.b16 %v1236, %v1234
        %v1375 = vpack.c.b16 %v1237, %v1235
        %v1376 = vpack.c.b16 %v1240, %v1238
        %v1377 = vpack.c.b16 %v1241, %v1239
        %v1378 = vpack.c.b16 %v1244, %v1242
        %v1379 = vpack.c.b16 %v1245, %v1243
        %v1380 = vpack.c.b16 %v1248, %v1246
        %v1381 = vpack.c.b16 %v1249, %v1247
        %v1382 = vpack.c.b16 %v1252, %v1250
        %v1383 = vpack.c.b16 %v1253, %v1251
        %v1384 = vpack.c.b16 %v1256, %v1254
        %v1385 = vpack.c.b16 %v1257, %v1255
        %v1386 = vpack.c.b16 %v1260, %v1258
        %v1387 = vpack.c.b16 %v1261, %v1259
        %v1388 = vpack.c.b16 %v1264, %v1262
        %v1389 = vpack.c.b16 %v1265, %v1263
        %v1390 = vpack.c.b16 %v1268, %v1266
        %v1391 = vpack.c.b16 %v1269, %v1267
        %v1392 = vpack.c.b16 %v1272, %v1270
        %v1393 = vpack.c.b16 %v1273, %v1271
        %v1394 = vpack.c.b16 %v1276, %v1274
        %v1395 = vpack.c.b16 %v1277, %v1275
        %v1396 = vpack.c.b16 %v1280, %v1278
        %v1397 = vpack.c.b16 %v1281, %v1279
        %v1398 = vpack.c.b16 %v1284, %v1282
        %v1399 = vpack.c.b16 %v1285, %v1283
        %v1400 = vpack.c.b16 %v1288, %v1286
        %v1401 = vpack.c.b16 %v1289, %v1287
        %v1402 = vpack.c.b16 %v1292, %v1290
        %v1403 = vpack.c.b16 %v1293, %v1291
        %v1404 = vpack.c.b16 %v1296, %v1294
        %v1405 = vpack.c.b16 %v1297, %v1295
        %v1406 = vpack.c.b16 %v1300, %v1298
        %v1407 = vpack.c.b16 %v1301, %v1299
        %v1408 = vpack.c.b16 %v1304, %v1302
        %v1409 = vpack.c.b16 %v1305, %v1303
        %v1410 = vpack.c.b16 %v1308, %v1306
        %v1411 = vpack.c.b16 %v1309, %v1307
        %v1412 = vpack.c.b16 %v1312, %v1310
        %v1413 = vpack.c.b16 %v1313, %v1311
        %v1414 = vpack.c.b16 %v1316, %v1314
        %v1415 = vpack.c.b16 %v1317, %v1315
        %vm1514 = vcmask 130048
        %v1516 = vsel %vm1514, %v513, 0
        %v1519 = vsel %vm1514, %v520, 0
        %v1522 = vsel %vm1514, %v527, 0
        %v1525 = vsel %vm1514, %v534, 0
        %v1528 = vsel %vm1514, %v541, 0
        %v1531 = vsel %vm1514, %v548, 0
        %v1534 = vsel %vm1514, %v555, 0
        %v1537 = vsel %vm1514, %v562, 0
        %v1540 = vsel %vm1514, %v569, 0
        %v1543 = vsel %vm1514, %v576, 0
        %v1546 = vsel %vm1514, %v583, 0
        %v1549 = vsel %vm1514, %v590, 0
        %v1552 = vsel %vm1514, %v597, 0
        %v1555 = vsel %vm1514, %v604, 0
        %v1558 = vsel %vm1514, %v611, 0
        %v1561 = vsel %vm1514, %v618, 0
        %1563 = vmatprep.subr.bf16.mxu0 %v1319
        %1564 = vmatpush1.bf16.msra.mxu0 %v1318
        %1565 = vmatprep.subr.bf16.mxu0 %v1321
        %1566 = vmatpush1.bf16.msra.mxu0 %v1320
        %1567 = vmatprep.subr.bf16.mxu0 %v1323
        %1568 = vmatpush1.bf16.msra.mxu0 %v1322
        %1569 = vmatprep.subr.bf16.mxu0 %v1325
        %1570 = vmatpush1.bf16.msra.mxu0 %v1324
        %1571 = vmatprep.subr.bf16.mxu0 %v1327
        %1572 = vmatpush1.bf16.msra.mxu0 %v1326
        %1573 = vmatprep.subr.bf16.mxu0 %v1329
        %1574 = vmatpush1.bf16.msra.mxu0 %v1328
        %1575 = vmatprep.subr.bf16.mxu0 %v1331
        %1576 = vmatpush1.bf16.msra.mxu0 %v1330
        %1577 = vmatprep.subr.bf16.mxu0 %v1333
        %1578 = vmatpush1.bf16.msra.mxu0 %v1332
        %1579 = vmatprep.subr.bf16.mxu0 %v1335
        %1580 = vmatpush1.bf16.msra.mxu0 %v1334
        %1581 = vmatprep.subr.bf16.mxu0 %v1337
        %1582 = vmatpush1.bf16.msra.mxu0 %v1336
        %1583 = vmatprep.subr.bf16.mxu0 %v1339
        %1584 = vmatpush1.bf16.msra.mxu0 %v1338
        %1585 = vmatprep.subr.bf16.mxu0 %v1341
        %1586 = vmatpush1.bf16.msra.mxu0 %v1340
        %1587 = vmatprep.subr.bf16.mxu0 %v1343
        %1588 = vmatpush1.bf16.msra.mxu0 %v1342
        %1589 = vmatprep.subr.bf16.mxu0 %v1345
        %1590 = vmatpush1.bf16.msra.mxu0 %v1344
        %1591 = vmatprep.subr.bf16.mxu0 %v1347
        %1592 = vmatpush1.bf16.msra.mxu0 %v1346
        %1593 = vmatprep.subr.bf16.mxu0 %v1349
        %1594 = vmatpush1.bf16.msra.mxu0 %v1348
        %1595 = vmatprep.mubr.bf16.mxu0 %v508
        %1596 = vmatmul.mubr.bf16.gmra.mrb[0].mxu0 %v507
        %v1597 = vpop.f32.mrb[0].mxu0
        %v1598 = vadd.f32 %v866, %v1597
        %v1599 = vpop.f32.mrb[0].mxu0
        %v1600 = vadd.f32 %v868, %v1599
        %v1601 = vpop.f32.mrb[0].mxu0
        %v1602 = vadd.f32 %v870, %v1601
        %v1603 = vpop.f32.mrb[0].mxu0
        %v1604 = vadd.f32 %v872, %v1603
        %1605 = vmatprep.mubr.bf16.mxu0 %v515
        %1606 = vmatmul.mubr.bf16.gmra.mrb[0].mxu0 %v514
        %v1607 = vpop.f32.mrb[0].mxu0
        %v1608 = vadd.f32 %v876, %v1607
        %v1609 = vpop.f32.mrb[0].mxu0
        %v1610 = vadd.f32 %v878, %v1609
        %v1611 = vpop.f32.mrb[0].mxu0
        %v1612 = vadd.f32 %v880, %v1611
        %v1613 = vpop.f32.mrb[0].mxu0
        %v1614 = vadd.f32 %v882, %v1613
        %1615 = vmatprep.mubr.bf16.mxu0 %v522
        %1616 = vmatmul.mubr.bf16.gmra.mrb[0].mxu0 %v521
        %v1617 = vpop.f32.mrb[0].mxu0
        %v1618 = vadd.f32 %v886, %v1617
        %v1619 = vpop.f32.mrb[0].mxu0
        %v1620 = vadd.f32 %v888, %v1619
        %v1621 = vpop.f32.mrb[0].mxu0
        %v1622 = vadd.f32 %v890, %v1621
        %v1623 = vpop.f32.mrb[0].mxu0
        %v1624 = vadd.f32 %v892, %v1623
        %1625 = vmatprep.mubr.bf16.mxu0 %v529
        %1626 = vmatmul.mubr.bf16.gmra.mrb[0].mxu0 %v528
        %v1627 = vpop.f32.mrb[0].mxu0
        %v1628 = vadd.f32 %v896, %v1627
        %v1629 = vpop.f32.mrb[0].mxu0
        %v1630 = vadd.f32 %v898, %v1629
        %v1631 = vpop.f32.mrb[0].mxu0
        %v1632 = vadd.f32 %v900, %v1631
        %v1633 = vpop.f32.mrb[0].mxu0
        %v1634 = vadd.f32 %v902, %v1633
        %1635 = vmatprep.mubr.bf16.mxu0 %v536
        %1636 = vmatmul.mubr.bf16.gmra.mrb[0].mxu0 %v535
        %v1637 = vpop.f32.mrb[0].mxu0
        %v1638 = vadd.f32 %v906, %v1637
        %v1639 = vpop.f32.mrb[0].mxu0
        %v1640 = vadd.f32 %v908, %v1639
        %v1641 = vpop.f32.mrb[0].mxu0
        %v1642 = vadd.f32 %v910, %v1641
        %v1643 = vpop.f32.mrb[0].mxu0
        %v1644 = vadd.f32 %v912, %v1643
        %1645 = vmatprep.mubr.bf16.mxu0 %v543
        %1646 = vmatmul.mubr.bf16.gmra.mrb[0].mxu0 %v542
        %v1647 = vpop.f32.mrb[0].mxu0
        %v1648 = vadd.f32 %v916, %v1647
        %v1649 = vpop.f32.mrb[0].mxu0
        %v1650 = vadd.f32 %v918, %v1649
        %v1651 = vpop.f32.mrb[0].mxu0
        %v1652 = vadd.f32 %v920, %v1651
        %v1653 = vpop.f32.mrb[0].mxu0
        %v1654 = vadd.f32 %v922, %v1653
        %1655 = vmatprep.mubr.bf16.mxu0 %v550
        %1656 = vmatmul.mubr.bf16.gmra.mrb[0].mxu0 %v549
        %v1657 = vpop.f32.mrb[0].mxu0
        %v1658 = vadd.f32 %v926, %v1657
        %v1659 = vpop.f32.mrb[0].mxu0
        %v1660 = vadd.f32 %v928, %v1659
        %v1661 = vpop.f32.mrb[0].mxu0
        %v1662 = vadd.f32 %v930, %v1661
        %v1663 = vpop.f32.mrb[0].mxu0
        %v1664 = vadd.f32 %v932, %v1663
        %1665 = vmatprep.mubr.bf16.mxu0 %v557
        %1666 = vmatmul.mubr.bf16.gmra.mrb[0].mxu0 %v556
        %v1667 = vpop.f32.mrb[0].mxu0
        %v1668 = vadd.f32 %v936, %v1667
        %v1669 = vpop.f32.mrb[0].mxu0
        %v1670 = vadd.f32 %v938, %v1669
        %v1671 = vpop.f32.mrb[0].mxu0
        %v1672 = vadd.f32 %v940, %v1671
        %v1673 = vpop.f32.mrb[0].mxu0
        %v1674 = vadd.f32 %v942, %v1673
        %1675 = vmatprep.mubr.bf16.mxu0 %v564
        %1676 = vmatmul.mubr.bf16.gmra.mrb[0].mxu0 %v563
        %v1677 = vpop.f32.mrb[0].mxu0
        %v1678 = vadd.f32 %v946, %v1677
        %v1679 = vpop.f32.mrb[0].mxu0
        %v1680 = vadd.f32 %v948, %v1679
        %v1681 = vpop.f32.mrb[0].mxu0
        %v1682 = vadd.f32 %v950, %v1681
        %v1683 = vpop.f32.mrb[0].mxu0
        %v1684 = vadd.f32 %v952, %v1683
        %1685 = vmatprep.mubr.bf16.mxu0 %v571
        %1686 = vmatmul.mubr.bf16.gmra.mrb[0].mxu0 %v570
        %v1687 = vpop.f32.mrb[0].mxu0
        %v1688 = vadd.f32 %v956, %v1687
        %v1689 = vpop.f32.mrb[0].mxu0
        %v1690 = vadd.f32 %v958, %v1689
        %v1691 = vpop.f32.mrb[0].mxu0
        %v1692 = vadd.f32 %v960, %v1691
        %v1693 = vpop.f32.mrb[0].mxu0
        %v1694 = vadd.f32 %v962, %v1693
        %1695 = vmatprep.mubr.bf16.mxu0 %v578
        %1696 = vmatmul.mubr.bf16.gmra.mrb[0].mxu0 %v577
        %v1697 = vpop.f32.mrb[0].mxu0
        %v1698 = vadd.f32 %v966, %v1697
        %v1699 = vpop.f32.mrb[0].mxu0
        %v1700 = vadd.f32 %v968, %v1699
        %v1701 = vpop.f32.mrb[0].mxu0
        %v1702 = vadd.f32 %v970, %v1701
        %v1703 = vpop.f32.mrb[0].mxu0
        %v1704 = vadd.f32 %v972, %v1703
        %1705 = vmatprep.mubr.bf16.mxu0 %v585
        %1706 = vmatmul.mubr.bf16.gmra.mrb[0].mxu0 %v584
        %v1707 = vpop.f32.mrb[0].mxu0
        %v1708 = vadd.f32 %v976, %v1707
        %v1709 = vpop.f32.mrb[0].mxu0
        %v1710 = vadd.f32 %v978, %v1709
        %v1711 = vpop.f32.mrb[0].mxu0
        %v1712 = vadd.f32 %v980, %v1711
        %v1713 = vpop.f32.mrb[0].mxu0
        %v1714 = vadd.f32 %v982, %v1713
        %1715 = vmatprep.mubr.bf16.mxu0 %v592
        %1716 = vmatmul.mubr.bf16.gmra.mrb[0].mxu0 %v591
        %v1717 = vpop.f32.mrb[0].mxu0
        %v1718 = vadd.f32 %v986, %v1717
        %v1719 = vpop.f32.mrb[0].mxu0
        %v1720 = vadd.f32 %v988, %v1719
        %v1721 = vpop.f32.mrb[0].mxu0
        %v1722 = vadd.f32 %v990, %v1721
        %v1723 = vpop.f32.mrb[0].mxu0
        %v1724 = vadd.f32 %v992, %v1723
        %1725 = vmatprep.mubr.bf16.mxu0 %v599
        %1726 = vmatmul.mubr.bf16.gmra.mrb[0].mxu0 %v598
        %v1727 = vpop.f32.mrb[0].mxu0
        %v1728 = vadd.f32 %v996, %v1727
        %v1729 = vpop.f32.mrb[0].mxu0
        %v1730 = vadd.f32 %v998, %v1729
        %v1731 = vpop.f32.mrb[0].mxu0
        %v1732 = vadd.f32 %v1000, %v1731
        %v1733 = vpop.f32.mrb[0].mxu0
        %v1734 = vadd.f32 %v1002, %v1733
        %1735 = vmatprep.mubr.bf16.mxu0 %v606
        %1736 = vmatmul.mubr.bf16.gmra.mrb[0].mxu0 %v605
        %v1737 = vpop.f32.mrb[0].mxu0
        %v1738 = vadd.f32 %v1006, %v1737
        %v1739 = vpop.f32.mrb[0].mxu0
        %v1740 = vadd.f32 %v1008, %v1739
        %v1741 = vpop.f32.mrb[0].mxu0
        %v1742 = vadd.f32 %v1010, %v1741
        %v1743 = vpop.f32.mrb[0].mxu0
        %v1744 = vadd.f32 %v1012, %v1743
        %1745 = vmatprep.mubr.bf16.mxu0 %v613
        %1746 = vmatmul.mubr.bf16.gmra.mrb[0].mxu0 %v612
        %v1747 = vpop.f32.mrb[0].mxu0
        %v1748 = vadd.f32 %v1016, %v1747
        %v1749 = vpop.f32.mrb[0].mxu0
        %v1750 = vadd.f32 %v1018, %v1749
        %v1751 = vpop.f32.mrb[0].mxu0
        %v1752 = vadd.f32 %v1020, %v1751
        %v1753 = vpop.f32.mrb[0].mxu0
        %v1754 = vadd.f32 %v1022, %v1753
        %1755 = vdwg.mxu0
        %1756 = vmatprep.subr.bf16.mxu0 %v1351
        %1757 = vmatpush1.bf16.msra.mxu0 %v1350
        %1758 = vmatprep.subr.bf16.mxu0 %v1353
        %1759 = vmatpush1.bf16.msra.mxu0 %v1352
        %1760 = vmatprep.subr.bf16.mxu0 %v1355
        %1761 = vmatpush1.bf16.msra.mxu0 %v1354
        %1762 = vmatprep.subr.bf16.mxu0 %v1357
        %1763 = vmatpush1.bf16.msra.mxu0 %v1356
        %1764 = vmatprep.subr.bf16.mxu0 %v1359
        %1765 = vmatpush1.bf16.msra.mxu0 %v1358
        %1766 = vmatprep.subr.bf16.mxu0 %v1361
        %1767 = vmatpush1.bf16.msra.mxu0 %v1360
        %1768 = vmatprep.subr.bf16.mxu0 %v1363
        %1769 = vmatpush1.bf16.msra.mxu0 %v1362
        %1770 = vmatprep.subr.bf16.mxu0 %v1365
        %1771 = vmatpush1.bf16.msra.mxu0 %v1364
        %1772 = vmatprep.subr.bf16.mxu0 %v1367
        %1773 = vmatpush1.bf16.msra.mxu0 %v1366
        %1774 = vmatprep.subr.bf16.mxu0 %v1369
        %1775 = vmatpush1.bf16.msra.mxu0 %v1368
        %1776 = vmatprep.subr.bf16.mxu0 %v1371
        %1777 = vmatpush1.bf16.msra.mxu0 %v1370
        %1778 = vmatprep.subr.bf16.mxu0 %v1373
        %1779 = vmatpush1.bf16.msra.mxu0 %v1372
        %1780 = vmatprep.subr.bf16.mxu0 %v1375
        %1781 = vmatpush1.bf16.msra.mxu0 %v1374
        %1782 = vmatprep.subr.bf16.mxu0 %v1377
        %1783 = vmatpush1.bf16.msra.mxu0 %v1376
        %1784 = vmatprep.subr.bf16.mxu0 %v1379
        %1785 = vmatpush1.bf16.msra.mxu0 %v1378
        %1786 = vmatprep.subr.bf16.mxu0 %v1381
        %1787 = vmatpush1.bf16.msra.mxu0 %v1380
        %1788 = vmatprep.mubr.bf16.mxu0 %v510
        %1789 = vmatmul.mubr.bf16.gmra.mrb[0].mxu0 %v509
        %v1790 = vpop.f32.mrb[0].mxu0
        %v1791 = vadd.f32 %v1598, %v1790
        %v1792 = vpop.f32.mrb[0].mxu0
        %v1793 = vadd.f32 %v1600, %v1792
        %v1794 = vpop.f32.mrb[0].mxu0
        %v1795 = vadd.f32 %v1602, %v1794
        %v1796 = vpop.f32.mrb[0].mxu0
        %v1797 = vadd.f32 %v1604, %v1796
        %1798 = vmatprep.mubr.bf16.mxu0 %v517
        %1799 = vmatmul.mubr.bf16.gmra.mrb[0].mxu0 %v516
        %v1800 = vpop.f32.mrb[0].mxu0
        %v1801 = vadd.f32 %v1608, %v1800
        %v1802 = vpop.f32.mrb[0].mxu0
        %v1803 = vadd.f32 %v1610, %v1802
        %v1804 = vpop.f32.mrb[0].mxu0
        %v1805 = vadd.f32 %v1612, %v1804
        %v1806 = vpop.f32.mrb[0].mxu0
        %v1807 = vadd.f32 %v1614, %v1806
        %1808 = vmatprep.mubr.bf16.mxu0 %v524
        %1809 = vmatmul.mubr.bf16.gmra.mrb[0].mxu0 %v523
        %v1810 = vpop.f32.mrb[0].mxu0
        %v1811 = vadd.f32 %v1618, %v1810
        %v1812 = vpop.f32.mrb[0].mxu0
        %v1813 = vadd.f32 %v1620, %v1812
        %v1814 = vpop.f32.mrb[0].mxu0
        %v1815 = vadd.f32 %v1622, %v1814
        %v1816 = vpop.f32.mrb[0].mxu0
        %v1817 = vadd.f32 %v1624, %v1816
        %1818 = vmatprep.mubr.bf16.mxu0 %v531
        %1819 = vmatmul.mubr.bf16.gmra.mrb[0].mxu0 %v530
        %v1820 = vpop.f32.mrb[0].mxu0
        %v1821 = vadd.f32 %v1628, %v1820
        %v1822 = vpop.f32.mrb[0].mxu0
        %v1823 = vadd.f32 %v1630, %v1822
        %v1824 = vpop.f32.mrb[0].mxu0
        %v1825 = vadd.f32 %v1632, %v1824
        %v1826 = vpop.f32.mrb[0].mxu0
        %v1827 = vadd.f32 %v1634, %v1826
        %1828 = vmatprep.mubr.bf16.mxu0 %v538
        %1829 = vmatmul.mubr.bf16.gmra.mrb[0].mxu0 %v537
        %v1830 = vpop.f32.mrb[0].mxu0
        %v1831 = vadd.f32 %v1638, %v1830
        %v1832 = vpop.f32.mrb[0].mxu0
        %v1833 = vadd.f32 %v1640, %v1832
        %v1834 = vpop.f32.mrb[0].mxu0
        %v1835 = vadd.f32 %v1642, %v1834
        %v1836 = vpop.f32.mrb[0].mxu0
        %v1837 = vadd.f32 %v1644, %v1836
        %1838 = vmatprep.mubr.bf16.mxu0 %v545
        %1839 = vmatmul.mubr.bf16.gmra.mrb[0].mxu0 %v544
        %v1840 = vpop.f32.mrb[0].mxu0
        %v1841 = vadd.f32 %v1648, %v1840
        %v1842 = vpop.f32.mrb[0].mxu0
        %v1843 = vadd.f32 %v1650, %v1842
        %v1844 = vpop.f32.mrb[0].mxu0
        %v1845 = vadd.f32 %v1652, %v1844
        %v1846 = vpop.f32.mrb[0].mxu0
        %v1847 = vadd.f32 %v1654, %v1846
        %1848 = vmatprep.mubr.bf16.mxu0 %v552
        %1849 = vmatmul.mubr.bf16.gmra.mrb[0].mxu0 %v551
        %v1850 = vpop.f32.mrb[0].mxu0
        %v1851 = vadd.f32 %v1658, %v1850
        %v1852 = vpop.f32.mrb[0].mxu0
        %v1853 = vadd.f32 %v1660, %v1852
        %v1854 = vpop.f32.mrb[0].mxu0
        %v1855 = vadd.f32 %v1662, %v1854
        %v1856 = vpop.f32.mrb[0].mxu0
        %v1857 = vadd.f32 %v1664, %v1856
        %1858 = vmatprep.mubr.bf16.mxu0 %v559
        %1859 = vmatmul.mubr.bf16.gmra.mrb[0].mxu0 %v558
        %v1860 = vpop.f32.mrb[0].mxu0
        %v1861 = vadd.f32 %v1668, %v1860
        %v1862 = vpop.f32.mrb[0].mxu0
        %v1863 = vadd.f32 %v1670, %v1862
        %v1864 = vpop.f32.mrb[0].mxu0
        %v1865 = vadd.f32 %v1672, %v1864
        %v1866 = vpop.f32.mrb[0].mxu0
        %v1867 = vadd.f32 %v1674, %v1866
        %1868 = vmatprep.mubr.bf16.mxu0 %v566
        %1869 = vmatmul.mubr.bf16.gmra.mrb[0].mxu0 %v565
        %v1870 = vpop.f32.mrb[0].mxu0
        %v1871 = vadd.f32 %v1678, %v1870
        %v1872 = vpop.f32.mrb[0].mxu0
        %v1873 = vadd.f32 %v1680, %v1872
        %v1874 = vpop.f32.mrb[0].mxu0
        %v1875 = vadd.f32 %v1682, %v1874
        %v1876 = vpop.f32.mrb[0].mxu0
        %v1877 = vadd.f32 %v1684, %v1876
        %1878 = vmatprep.mubr.bf16.mxu0 %v573
        %1879 = vmatmul.mubr.bf16.gmra.mrb[0].mxu0 %v572
        %v1880 = vpop.f32.mrb[0].mxu0
        %v1881 = vadd.f32 %v1688, %v1880
        %v1882 = vpop.f32.mrb[0].mxu0
        %v1883 = vadd.f32 %v1690, %v1882
        %v1884 = vpop.f32.mrb[0].mxu0
        %v1885 = vadd.f32 %v1692, %v1884
        %v1886 = vpop.f32.mrb[0].mxu0
        %v1887 = vadd.f32 %v1694, %v1886
        %1888 = vmatprep.mubr.bf16.mxu0 %v580
        %1889 = vmatmul.mubr.bf16.gmra.mrb[0].mxu0 %v579
        %v1890 = vpop.f32.mrb[0].mxu0
        %v1891 = vadd.f32 %v1698, %v1890
        %v1892 = vpop.f32.mrb[0].mxu0
        %v1893 = vadd.f32 %v1700, %v1892
        %v1894 = vpop.f32.mrb[0].mxu0
        %v1895 = vadd.f32 %v1702, %v1894
        %v1896 = vpop.f32.mrb[0].mxu0
        %v1897 = vadd.f32 %v1704, %v1896
        %1898 = vmatprep.mubr.bf16.mxu0 %v587
        %1899 = vmatmul.mubr.bf16.gmra.mrb[0].mxu0 %v586
        %v1900 = vpop.f32.mrb[0].mxu0
        %v1901 = vadd.f32 %v1708, %v1900
        %v1902 = vpop.f32.mrb[0].mxu0
        %v1903 = vadd.f32 %v1710, %v1902
        %v1904 = vpop.f32.mrb[0].mxu0
        %v1905 = vadd.f32 %v1712, %v1904
        %v1906 = vpop.f32.mrb[0].mxu0
        %v1907 = vadd.f32 %v1714, %v1906
        %1908 = vmatprep.mubr.bf16.mxu0 %v594
        %1909 = vmatmul.mubr.bf16.gmra.mrb[0].mxu0 %v593
        %v1910 = vpop.f32.mrb[0].mxu0
        %v1911 = vadd.f32 %v1718, %v1910
        %v1912 = vpop.f32.mrb[0].mxu0
        %v1913 = vadd.f32 %v1720, %v1912
        %v1914 = vpop.f32.mrb[0].mxu0
        %v1915 = vadd.f32 %v1722, %v1914
        %v1916 = vpop.f32.mrb[0].mxu0
        %v1917 = vadd.f32 %v1724, %v1916
        %1918 = vmatprep.mubr.bf16.mxu0 %v601
        %1919 = vmatmul.mubr.bf16.gmra.mrb[0].mxu0 %v600
        %v1920 = vpop.f32.mrb[0].mxu0
        %v1921 = vadd.f32 %v1728, %v1920
        %v1922 = vpop.f32.mrb[0].mxu0
        %v1923 = vadd.f32 %v1730, %v1922
        %v1924 = vpop.f32.mrb[0].mxu0
        %v1925 = vadd.f32 %v1732, %v1924
        %v1926 = vpop.f32.mrb[0].mxu0
        %v1927 = vadd.f32 %v1734, %v1926
        %1928 = vmatprep.mubr.bf16.mxu0 %v608
        %1929 = vmatmul.mubr.bf16.gmra.mrb[0].mxu0 %v607
        %v1930 = vpop.f32.mrb[0].mxu0
        %v1931 = vadd.f32 %v1738, %v1930
        %v1932 = vpop.f32.mrb[0].mxu0
        %v1933 = vadd.f32 %v1740, %v1932
        %v1934 = vpop.f32.mrb[0].mxu0
        %v1935 = vadd.f32 %v1742, %v1934
        %v1936 = vpop.f32.mrb[0].mxu0
        %v1937 = vadd.f32 %v1744, %v1936
        %1938 = vmatprep.mubr.bf16.mxu0 %v615
        %1939 = vmatmul.mubr.bf16.gmra.mrb[0].mxu0 %v614
        %v1940 = vpop.f32.mrb[0].mxu0
        %v1941 = vadd.f32 %v1748, %v1940
        %v1942 = vpop.f32.mrb[0].mxu0
        %v1943 = vadd.f32 %v1750, %v1942
        %v1944 = vpop.f32.mrb[0].mxu0
        %v1945 = vadd.f32 %v1752, %v1944
        %v1946 = vpop.f32.mrb[0].mxu0
        %v1947 = vadd.f32 %v1754, %v1946
        %1948 = vdwg.mxu0
        %1949 = vmatprep.subr.bf16.mxu0 %v1383
        %1950 = vmatpush1.bf16.msra.mxu0 %v1382
        %1951 = vmatprep.subr.bf16.mxu0 %v1385
        %1952 = vmatpush1.bf16.msra.mxu0 %v1384
        %1953 = vmatprep.subr.bf16.mxu0 %v1387
        %1954 = vmatpush1.bf16.msra.mxu0 %v1386
        %1955 = vmatprep.subr.bf16.mxu0 %v1389
        %1956 = vmatpush1.bf16.msra.mxu0 %v1388
        %1957 = vmatprep.subr.bf16.mxu0 %v1391
        %1958 = vmatpush1.bf16.msra.mxu0 %v1390
        %1959 = vmatprep.subr.bf16.mxu0 %v1393
        %1960 = vmatpush1.bf16.msra.mxu0 %v1392
        %1961 = vmatprep.subr.bf16.mxu0 %v1395
        %1962 = vmatpush1.bf16.msra.mxu0 %v1394
        %1963 = vmatprep.subr.bf16.mxu0 %v1397
        %1964 = vmatpush1.bf16.msra.mxu0 %v1396
        %1965 = vmatprep.subr.bf16.mxu0 %v1399
        %1966 = vmatpush1.bf16.msra.mxu0 %v1398
        %1967 = vmatprep.subr.bf16.mxu0 %v1401
        %1968 = vmatpush1.bf16.msra.mxu0 %v1400
        %1969 = vmatprep.subr.bf16.mxu0 %v1403
        %1970 = vmatpush1.bf16.msra.mxu0 %v1402
        %1971 = vmatprep.subr.bf16.mxu0 %v1405
        %1972 = vmatpush1.bf16.msra.mxu0 %v1404
        %1973 = vmatprep.subr.bf16.mxu0 %v1407
        %1974 = vmatpush1.bf16.msra.mxu0 %v1406
        %1975 = vmatprep.subr.bf16.mxu0 %v1409
        %1976 = vmatpush1.bf16.msra.mxu0 %v1408
        %1977 = vmatprep.subr.bf16.mxu0 %v1411
        %1978 = vmatpush1.bf16.msra.mxu0 %v1410
        %1979 = vmatprep.subr.bf16.mxu0 %v1413
        %1980 = vmatpush1.bf16.msra.mxu0 %v1412
        %1981 = vmatprep.mubr.bf16.mxu0 %v512
        %1982 = vmatmul.mubr.bf16.gmra.mrb[0].mxu0 %v511
        %v1983 = vpop.f32.mrb[0].mxu0
        %v1984 = vadd.f32 %v1791, %v1983
        %v1985 = vpop.f32.mrb[0].mxu0
        %v1986 = vadd.f32 %v1793, %v1985
        %v1987 = vpop.f32.mrb[0].mxu0
        %v1988 = vadd.f32 %v1795, %v1987
        %v1989 = vpop.f32.mrb[0].mxu0
        %v1990 = vadd.f32 %v1797, %v1989
        %1991 = vmatprep.mubr.bf16.mxu0 %v519
        %1992 = vmatmul.mubr.bf16.gmra.mrb[0].mxu0 %v518
        %v1993 = vpop.f32.mrb[0].mxu0
        %v1994 = vadd.f32 %v1801, %v1993
        %v1995 = vpop.f32.mrb[0].mxu0
        %v1996 = vadd.f32 %v1803, %v1995
        %v1997 = vpop.f32.mrb[0].mxu0
        %v1998 = vadd.f32 %v1805, %v1997
        %v1999 = vpop.f32.mrb[0].mxu0
        %v2000 = vadd.f32 %v1807, %v1999
        %2001 = vmatprep.mubr.bf16.mxu0 %v526
        %2002 = vmatmul.mubr.bf16.gmra.mrb[0].mxu0 %v525
        %v2003 = vpop.f32.mrb[0].mxu0
        %v2004 = vadd.f32 %v1811, %v2003
        %v2005 = vpop.f32.mrb[0].mxu0
        %v2006 = vadd.f32 %v1813, %v2005
        %v2007 = vpop.f32.mrb[0].mxu0
        %v2008 = vadd.f32 %v1815, %v2007
        %v2009 = vpop.f32.mrb[0].mxu0
        %v2010 = vadd.f32 %v1817, %v2009
        %2011 = vmatprep.mubr.bf16.mxu0 %v533
        %2012 = vmatmul.mubr.bf16.gmra.mrb[0].mxu0 %v532
        %v2013 = vpop.f32.mrb[0].mxu0
        %v2014 = vadd.f32 %v1821, %v2013
        %v2015 = vpop.f32.mrb[0].mxu0
        %v2016 = vadd.f32 %v1823, %v2015
        %v2017 = vpop.f32.mrb[0].mxu0
        %v2018 = vadd.f32 %v1825, %v2017
        %v2019 = vpop.f32.mrb[0].mxu0
        %v2020 = vadd.f32 %v1827, %v2019
        %2021 = vmatprep.mubr.bf16.mxu0 %v540
        %2022 = vmatmul.mubr.bf16.gmra.mrb[0].mxu0 %v539
        %v2023 = vpop.f32.mrb[0].mxu0
        %v2024 = vadd.f32 %v1831, %v2023
        %v2025 = vpop.f32.mrb[0].mxu0
        %v2026 = vadd.f32 %v1833, %v2025
        %v2027 = vpop.f32.mrb[0].mxu0
        %v2028 = vadd.f32 %v1835, %v2027
        %v2029 = vpop.f32.mrb[0].mxu0
        %v2030 = vadd.f32 %v1837, %v2029
        %2031 = vmatprep.mubr.bf16.mxu0 %v547
        %2032 = vmatmul.mubr.bf16.gmra.mrb[0].mxu0 %v546
        %v2033 = vpop.f32.mrb[0].mxu0
        %v2034 = vadd.f32 %v1841, %v2033
        %v2035 = vpop.f32.mrb[0].mxu0
        %v2036 = vadd.f32 %v1843, %v2035
        %v2037 = vpop.f32.mrb[0].mxu0
        %v2038 = vadd.f32 %v1845, %v2037
        %v2039 = vpop.f32.mrb[0].mxu0
        %v2040 = vadd.f32 %v1847, %v2039
        %2041 = vmatprep.mubr.bf16.mxu0 %v554
        %2042 = vmatmul.mubr.bf16.gmra.mrb[0].mxu0 %v553
        %v2043 = vpop.f32.mrb[0].mxu0
        %v2044 = vadd.f32 %v1851, %v2043
        %v2045 = vpop.f32.mrb[0].mxu0
        %v2046 = vadd.f32 %v1853, %v2045
        %v2047 = vpop.f32.mrb[0].mxu0
        %v2048 = vadd.f32 %v1855, %v2047
        %v2049 = vpop.f32.mrb[0].mxu0
        %v2050 = vadd.f32 %v1857, %v2049
        %2051 = vmatprep.mubr.bf16.mxu0 %v561
        %2052 = vmatmul.mubr.bf16.gmra.mrb[0].mxu0 %v560
        %v2053 = vpop.f32.mrb[0].mxu0
        %v2054 = vadd.f32 %v1861, %v2053
        %v2055 = vpop.f32.mrb[0].mxu0
        %v2056 = vadd.f32 %v1863, %v2055
        %v2057 = vpop.f32.mrb[0].mxu0
        %v2058 = vadd.f32 %v1865, %v2057
        %v2059 = vpop.f32.mrb[0].mxu0
        %v2060 = vadd.f32 %v1867, %v2059
        %2061 = vmatprep.mubr.bf16.mxu0 %v568
        %2062 = vmatmul.mubr.bf16.gmra.mrb[0].mxu0 %v567
        %v2063 = vpop.f32.mrb[0].mxu0
        %v2064 = vadd.f32 %v1871, %v2063
        %v2065 = vpop.f32.mrb[0].mxu0
        %v2066 = vadd.f32 %v1873, %v2065
        %v2067 = vpop.f32.mrb[0].mxu0
        %v2068 = vadd.f32 %v1875, %v2067
        %v2069 = vpop.f32.mrb[0].mxu0
        %v2070 = vadd.f32 %v1877, %v2069
        %2071 = vmatprep.mubr.bf16.mxu0 %v575
        %2072 = vmatmul.mubr.bf16.gmra.mrb[0].mxu0 %v574
        %v2073 = vpop.f32.mrb[0].mxu0
        %v2074 = vadd.f32 %v1881, %v2073
        %v2075 = vpop.f32.mrb[0].mxu0
        %v2076 = vadd.f32 %v1883, %v2075
        %v2077 = vpop.f32.mrb[0].mxu0
        %v2078 = vadd.f32 %v1885, %v2077
        %v2079 = vpop.f32.mrb[0].mxu0
        %v2080 = vadd.f32 %v1887, %v2079
        %2081 = vmatprep.mubr.bf16.mxu0 %v582
        %2082 = vmatmul.mubr.bf16.gmra.mrb[0].mxu0 %v581
        %v2083 = vpop.f32.mrb[0].mxu0
        %v2084 = vadd.f32 %v1891, %v2083
        %v2085 = vpop.f32.mrb[0].mxu0
        %v2086 = vadd.f32 %v1893, %v2085
        %v2087 = vpop.f32.mrb[0].mxu0
        %v2088 = vadd.f32 %v1895, %v2087
        %v2089 = vpop.f32.mrb[0].mxu0
        %v2090 = vadd.f32 %v1897, %v2089
        %2091 = vmatprep.mubr.bf16.mxu0 %v589
        %2092 = vmatmul.mubr.bf16.gmra.mrb[0].mxu0 %v588
        %v2093 = vpop.f32.mrb[0].mxu0
        %v2094 = vadd.f32 %v1901, %v2093
        %v2095 = vpop.f32.mrb[0].mxu0
        %v2096 = vadd.f32 %v1903, %v2095
        %v2097 = vpop.f32.mrb[0].mxu0
        %v2098 = vadd.f32 %v1905, %v2097
        %v2099 = vpop.f32.mrb[0].mxu0
        %v2100 = vadd.f32 %v1907, %v2099
        %2101 = vmatprep.mubr.bf16.mxu0 %v596
        %2102 = vmatmul.mubr.bf16.gmra.mrb[0].mxu0 %v595
        %v2103 = vpop.f32.mrb[0].mxu0
        %v2104 = vadd.f32 %v1911, %v2103
        %v2105 = vpop.f32.mrb[0].mxu0
        %v2106 = vadd.f32 %v1913, %v2105
        %v2107 = vpop.f32.mrb[0].mxu0
        %v2108 = vadd.f32 %v1915, %v2107
        %v2109 = vpop.f32.mrb[0].mxu0
        %v2110 = vadd.f32 %v1917, %v2109
        %2111 = vmatprep.mubr.bf16.mxu0 %v603
        %2112 = vmatmul.mubr.bf16.gmra.mrb[0].mxu0 %v602
        %v2113 = vpop.f32.mrb[0].mxu0
        %v2114 = vadd.f32 %v1921, %v2113
        %v2115 = vpop.f32.mrb[0].mxu0
        %v2116 = vadd.f32 %v1923, %v2115
        %v2117 = vpop.f32.mrb[0].mxu0
        %v2118 = vadd.f32 %v1925, %v2117
        %v2119 = vpop.f32.mrb[0].mxu0
        %v2120 = vadd.f32 %v1927, %v2119
        %2121 = vmatprep.mubr.bf16.mxu0 %v610
        %2122 = vmatmul.mubr.bf16.gmra.mrb[0].mxu0 %v609
        %v2123 = vpop.f32.mrb[0].mxu0
        %v2124 = vadd.f32 %v1931, %v2123
        %v2125 = vpop.f32.mrb[0].mxu0
        %v2126 = vadd.f32 %v1933, %v2125
        %v2127 = vpop.f32.mrb[0].mxu0
        %v2128 = vadd.f32 %v1935, %v2127
        %v2129 = vpop.f32.mrb[0].mxu0
        %v2130 = vadd.f32 %v1937, %v2129
        %2131 = vmatprep.mubr.bf16.mxu0 %v617
        %2132 = vmatmul.mubr.bf16.gmra.mrb[0].mxu0 %v616
        %v2133 = vpop.f32.mrb[0].mxu0
        %v2134 = vadd.f32 %v1941, %v2133
        %v2135 = vpop.f32.mrb[0].mxu0
        %v2136 = vadd.f32 %v1943, %v2135
        %v2137 = vpop.f32.mrb[0].mxu0
        %v2138 = vadd.f32 %v1945, %v2137
        %v2139 = vpop.f32.mrb[0].mxu0
        %v2140 = vadd.f32 %v1947, %v2139
        %2141 = vdwg.mxu0
        %2142 = vmatprep.subr.bf16.mxu0 %v1415
        %2143 = vmatpush1.bf16.msra.mxu0 %v1414
        %2144 = vmatprep.subr.bf16.mxu0 0
        %2145 = vmatpush1.bf16.msra.mxu0 0
        %2146 = vmatprep.subr.bf16.mxu0 0
        %2147 = vmatpush1.bf16.msra.mxu0 0
        %2148 = vmatprep.subr.bf16.mxu0 0
        %2149 = vmatpush1.bf16.msra.mxu0 0
        %2150 = vmatprep.subr.bf16.mxu0 0
        %2151 = vmatpush1.bf16.msra.mxu0 0
        %2152 = vmatprep.subr.bf16.mxu0 0
        %2153 = vmatpush1.bf16.msra.mxu0 0
        %2154 = vmatprep.subr.bf16.mxu0 0
        %2155 = vmatpush1.bf16.msra.mxu0 0
        %2156 = vmatprep.subr.bf16.mxu0 0
        %2157 = vmatpush1.bf16.msra.mxu0 0
        %2158 = vmatprep.subr.bf16.mxu0 0
        %2159 = vmatpush1.bf16.msra.mxu0 0
        %2160 = vmatprep.subr.bf16.mxu0 0
        %2161 = vmatpush1.bf16.msra.mxu0 0
        %2162 = vmatprep.subr.bf16.mxu0 0
        %2163 = vmatpush1.bf16.msra.mxu0 0
        %2164 = vmatprep.subr.bf16.mxu0 0
        %2165 = vmatpush1.bf16.msra.mxu0 0
        %2166 = vmatprep.subr.bf16.mxu0 0
        %2167 = vmatpush1.bf16.msra.mxu0 0
        %2168 = vmatprep.subr.bf16.mxu0 0
        %2169 = vmatpush1.bf16.msra.mxu0 0
        %2170 = vmatprep.subr.bf16.mxu0 0
        %2171 = vmatpush1.bf16.msra.mxu0 0
        %2172 = vmatprep.subr.bf16.mxu0 0
        %2173 = vmatpush1.bf16.msra.mxu0 0
        %2174 = vmatprep.mubr.bf16.mxu0 0
        %2175 = vmatmul.mubr.bf16.gmra.mrb[0].mxu0 %v1516
        %v2176 = vpop.f32.mrb[0].mxu0
        %v2177 = vadd.f32 %v1984, %v2176
        %v2178 = vpop.f32.mrb[0].mxu0
        %v2179 = vadd.f32 %v1986, %v2178
        %v2180 = vpop.f32.mrb[0].mxu0
        %v2181 = vadd.f32 %v1988, %v2180
        %v2182 = vpop.f32.mrb[0].mxu0
        %v2183 = vadd.f32 %v1990, %v2182
        %2184 = vmatprep.mubr.bf16.mxu0 0
        %2185 = vmatmul.mubr.bf16.gmra.mrb[0].mxu0 %v1519
        %v2186 = vpop.f32.mrb[0].mxu0
        %v2187 = vadd.f32 %v1994, %v2186
        %v2188 = vpop.f32.mrb[0].mxu0
        %v2189 = vadd.f32 %v1996, %v2188
        %v2190 = vpop.f32.mrb[0].mxu0
        %v2191 = vadd.f32 %v1998, %v2190
        %v2192 = vpop.f32.mrb[0].mxu0
        %v2193 = vadd.f32 %v2000, %v2192
        %2194 = vmatprep.mubr.bf16.mxu0 0
        %2195 = vmatmul.mubr.bf16.gmra.mrb[0].mxu0 %v1522
        %v2196 = vpop.f32.mrb[0].mxu0
        %v2197 = vadd.f32 %v2004, %v2196
        %v2198 = vpop.f32.mrb[0].mxu0
        %v2199 = vadd.f32 %v2006, %v2198
        %v2200 = vpop.f32.mrb[0].mxu0
        %v2201 = vadd.f32 %v2008, %v2200
        %v2202 = vpop.f32.mrb[0].mxu0
        %v2203 = vadd.f32 %v2010, %v2202
        %2204 = vmatprep.mubr.bf16.mxu0 0
        %2205 = vmatmul.mubr.bf16.gmra.mrb[0].mxu0 %v1525
        %v2206 = vpop.f32.mrb[0].mxu0
        %v2207 = vadd.f32 %v2014, %v2206
        %v2208 = vpop.f32.mrb[0].mxu0
        %v2209 = vadd.f32 %v2016, %v2208
        %v2210 = vpop.f32.mrb[0].mxu0
        %v2211 = vadd.f32 %v2018, %v2210
        %v2212 = vpop.f32.mrb[0].mxu0
        %v2213 = vadd.f32 %v2020, %v2212
        %2214 = vmatprep.mubr.bf16.mxu0 0
        %2215 = vmatmul.mubr.bf16.gmra.mrb[0].mxu0 %v1528
        %v2216 = vpop.f32.mrb[0].mxu0
        %v2217 = vadd.f32 %v2024, %v2216
        %v2218 = vpop.f32.mrb[0].mxu0
        %v2219 = vadd.f32 %v2026, %v2218
        %v2220 = vpop.f32.mrb[0].mxu0
        %v2221 = vadd.f32 %v2028, %v2220
        %v2222 = vpop.f32.mrb[0].mxu0
        %v2223 = vadd.f32 %v2030, %v2222
        %2224 = vmatprep.mubr.bf16.mxu0 0
        %2225 = vmatmul.mubr.bf16.gmra.mrb[0].mxu0 %v1531
        %v2226 = vpop.f32.mrb[0].mxu0
        %v2227 = vadd.f32 %v2034, %v2226
        %v2228 = vpop.f32.mrb[0].mxu0
        %v2229 = vadd.f32 %v2036, %v2228
        %v2230 = vpop.f32.mrb[0].mxu0
        %v2231 = vadd.f32 %v2038, %v2230
        %v2232 = vpop.f32.mrb[0].mxu0
        %v2233 = vadd.f32 %v2040, %v2232
        %2234 = vmatprep.mubr.bf16.mxu0 0
        %2235 = vmatmul.mubr.bf16.gmra.mrb[0].mxu0 %v1534
        %v2236 = vpop.f32.mrb[0].mxu0
        %v2237 = vadd.f32 %v2044, %v2236
        %v2238 = vpop.f32.mrb[0].mxu0
        %v2239 = vadd.f32 %v2046, %v2238
        %v2240 = vpop.f32.mrb[0].mxu0
        %v2241 = vadd.f32 %v2048, %v2240
        %v2242 = vpop.f32.mrb[0].mxu0
        %v2243 = vadd.f32 %v2050, %v2242
        %2244 = vmatprep.mubr.bf16.mxu0 0
        %2245 = vmatmul.mubr.bf16.gmra.mrb[0].mxu0 %v1537
        %v2246 = vpop.f32.mrb[0].mxu0
        %v2247 = vadd.f32 %v2054, %v2246
        %v2248 = vpop.f32.mrb[0].mxu0
        %v2249 = vadd.f32 %v2056, %v2248
        %v2250 = vpop.f32.mrb[0].mxu0
        %v2251 = vadd.f32 %v2058, %v2250
        %v2252 = vpop.f32.mrb[0].mxu0
        %v2253 = vadd.f32 %v2060, %v2252
        %2254 = vmatprep.mubr.bf16.mxu0 0
        %2255 = vmatmul.mubr.bf16.gmra.mrb[0].mxu0 %v1540
        %v2256 = vpop.f32.mrb[0].mxu0
        %v2257 = vadd.f32 %v2064, %v2256
        %v2258 = vpop.f32.mrb[0].mxu0
        %v2259 = vadd.f32 %v2066, %v2258
        %v2260 = vpop.f32.mrb[0].mxu0
        %v2261 = vadd.f32 %v2068, %v2260
        %v2262 = vpop.f32.mrb[0].mxu0
        %v2263 = vadd.f32 %v2070, %v2262
        %2264 = vmatprep.mubr.bf16.mxu0 0
        %2265 = vmatmul.mubr.bf16.gmra.mrb[0].mxu0 %v1543
        %v2266 = vpop.f32.mrb[0].mxu0
        %v2267 = vadd.f32 %v2074, %v2266
        %v2268 = vpop.f32.mrb[0].mxu0
        %v2269 = vadd.f32 %v2076, %v2268
        %v2270 = vpop.f32.mrb[0].mxu0
        %v2271 = vadd.f32 %v2078, %v2270
        %v2272 = vpop.f32.mrb[0].mxu0
        %v2273 = vadd.f32 %v2080, %v2272
        %2274 = vmatprep.mubr.bf16.mxu0 0
        %2275 = vmatmul.mubr.bf16.gmra.mrb[0].mxu0 %v1546
        %v2276 = vpop.f32.mrb[0].mxu0
        %v2277 = vadd.f32 %v2084, %v2276
        %v2278 = vpop.f32.mrb[0].mxu0
        %v2279 = vadd.f32 %v2086, %v2278
        %v2280 = vpop.f32.mrb[0].mxu0
        %v2281 = vadd.f32 %v2088, %v2280
        %v2282 = vpop.f32.mrb[0].mxu0
        %v2283 = vadd.f32 %v2090, %v2282
        %2284 = vmatprep.mubr.bf16.mxu0 0
        %2285 = vmatmul.mubr.bf16.gmra.mrb[0].mxu0 %v1549
        %v2286 = vpop.f32.mrb[0].mxu0
        %v2287 = vadd.f32 %v2094, %v2286
        %v2288 = vpop.f32.mrb[0].mxu0
        %v2289 = vadd.f32 %v2096, %v2288
        %v2290 = vpop.f32.mrb[0].mxu0
        %v2291 = vadd.f32 %v2098, %v2290
        %v2292 = vpop.f32.mrb[0].mxu0
        %v2293 = vadd.f32 %v2100, %v2292
        %2294 = vmatprep.mubr.bf16.mxu0 0
        %2295 = vmatmul.mubr.bf16.gmra.mrb[0].mxu0 %v1552
        %v2296 = vpop.f32.mrb[0].mxu0
        %v2297 = vadd.f32 %v2104, %v2296
        %v2298 = vpop.f32.mrb[0].mxu0
        %v2299 = vadd.f32 %v2106, %v2298
        %v2300 = vpop.f32.mrb[0].mxu0
        %v2301 = vadd.f32 %v2108, %v2300
        %v2302 = vpop.f32.mrb[0].mxu0
        %v2303 = vadd.f32 %v2110, %v2302
        %2304 = vmatprep.mubr.bf16.mxu0 0
        %2305 = vmatmul.mubr.bf16.gmra.mrb[0].mxu0 %v1555
        %v2306 = vpop.f32.mrb[0].mxu0
        %v2307 = vadd.f32 %v2114, %v2306
        %v2308 = vpop.f32.mrb[0].mxu0
        %v2309 = vadd.f32 %v2116, %v2308
        %v2310 = vpop.f32.mrb[0].mxu0
        %v2311 = vadd.f32 %v2118, %v2310
        %v2312 = vpop.f32.mrb[0].mxu0
        %v2313 = vadd.f32 %v2120, %v2312
        %2314 = vmatprep.mubr.bf16.mxu0 0
        %2315 = vmatmul.mubr.bf16.gmra.mrb[0].mxu0 %v1558
        %v2316 = vpop.f32.mrb[0].mxu0
        %v2317 = vadd.f32 %v2124, %v2316
        %v2318 = vpop.f32.mrb[0].mxu0
        %v2319 = vadd.f32 %v2126, %v2318
        %v2320 = vpop.f32.mrb[0].mxu0
        %v2321 = vadd.f32 %v2128, %v2320
        %v2322 = vpop.f32.mrb[0].mxu0
        %v2323 = vadd.f32 %v2130, %v2322
        %2324 = vmatprep.mubr.bf16.mxu0 0
        %2325 = vmatmul.mubr.bf16.gmra.mrb[0].mxu0 %v1561
        %v2326 = vpop.f32.mrb[0].mxu0
        %v2327 = vadd.f32 %v2134, %v2326
        %v2328 = vpop.f32.mrb[0].mxu0
        %v2329 = vadd.f32 %v2136, %v2328
        %v2330 = vpop.f32.mrb[0].mxu0
        %v2331 = vadd.f32 %v2138, %v2330
        %v2332 = vpop.f32.mrb[0].mxu0
        %v2333 = vadd.f32 %v2140, %v2332
        %2334 = vdwg.mxu0
        %v2335 = vlaneseq
        %v2336 = vshrl.u32 %v2335, 7
        %v2337 = vsub.s32 0, %v2336
        %v2338 = vrot.slane %v281, %v2337
        %v2339 = vlaneseq
        %v2340 = vshrl.u32 %v2339, 7
        %v2341 = vsub.s32 0, %v2340
        %v2342 = vrot.slane %v282, %v2341
        %v2343 = vadd.f32 %v2177, %v2338
        %v2344 = vadd.f32 %v2179, %v2342
        %v2345 = vadd.f32 %v2181, %v2338
        %v2346 = vadd.f32 %v2183, %v2342
        %v2347 = vadd.f32 %v2187, %v2338
        %v2348 = vadd.f32 %v2189, %v2342
        %v2349 = vadd.f32 %v2191, %v2338
        %v2350 = vadd.f32 %v2193, %v2342
        %v2351 = vadd.f32 %v2197, %v2338
        %v2352 = vadd.f32 %v2199, %v2342
        %v2353 = vadd.f32 %v2201, %v2338
        %v2354 = vadd.f32 %v2203, %v2342
        %v2355 = vadd.f32 %v2207, %v2338
        %v2356 = vadd.f32 %v2209, %v2342
        %v2357 = vadd.f32 %v2211, %v2338
        %v2358 = vadd.f32 %v2213, %v2342
        %v2359 = vadd.f32 %v2217, %v2338
        %v2360 = vadd.f32 %v2219, %v2342
        %v2361 = vadd.f32 %v2221, %v2338
        %v2362 = vadd.f32 %v2223, %v2342
        %v2363 = vadd.f32 %v2227, %v2338
        %v2364 = vadd.f32 %v2229, %v2342
        %v2365 = vadd.f32 %v2231, %v2338
        %v2366 = vadd.f32 %v2233, %v2342
        %v2367 = vadd.f32 %v2237, %v2338
        %v2368 = vadd.f32 %v2239, %v2342
        %v2369 = vadd.f32 %v2241, %v2338
        %v2370 = vadd.f32 %v2243, %v2342
        %v2371 = vadd.f32 %v2247, %v2338
        %v2372 = vadd.f32 %v2249, %v2342
        %v2373 = vadd.f32 %v2251, %v2338
        %v2374 = vadd.f32 %v2253, %v2342
        %v2375 = vadd.f32 %v2257, %v2338
        %v2376 = vadd.f32 %v2259, %v2342
        %v2377 = vadd.f32 %v2261, %v2338
        %v2378 = vadd.f32 %v2263, %v2342
        %v2379 = vadd.f32 %v2267, %v2338
        %v2380 = vadd.f32 %v2269, %v2342
        %v2381 = vadd.f32 %v2271, %v2338
        %v2382 = vadd.f32 %v2273, %v2342
        %v2383 = vadd.f32 %v2277, %v2338
        %v2384 = vadd.f32 %v2279, %v2342
        %v2385 = vadd.f32 %v2281, %v2338
        %v2386 = vadd.f32 %v2283, %v2342
        %v2387 = vadd.f32 %v2287, %v2338
        %v2388 = vadd.f32 %v2289, %v2342
        %v2389 = vadd.f32 %v2291, %v2338
        %v2390 = vadd.f32 %v2293, %v2342
        %v2391 = vadd.f32 %v2297, %v2338
        %v2392 = vadd.f32 %v2299, %v2342
        %v2393 = vadd.f32 %v2301, %v2338
        %v2394 = vadd.f32 %v2303, %v2342
        %v2395 = vadd.f32 %v2307, %v2338
        %v2396 = vadd.f32 %v2309, %v2342
        %v2397 = vadd.f32 %v2311, %v2338
        %v2398 = vadd.f32 %v2313, %v2342
        %v2399 = vadd.f32 %v2317, %v2338
        %v2400 = vadd.f32 %v2319, %v2342
        %v2401 = vadd.f32 %v2321, %v2338
        %v2402 = vadd.f32 %v2323, %v2342
        %v2403 = vadd.f32 %v2327, %v2338
        %v2404 = vadd.f32 %v2329, %v2342
        %v2405 = vadd.f32 %v2331, %v2338
        %v2406 = vadd.f32 %v2333, %v2342
        %vm2407 = vcmp.gt.f32.partialorder %v2343, 0.0
        %vm2408 = vcmp.gt.f32.partialorder %v2344, 0.0
        %vm2409 = vcmp.gt.f32.partialorder %v2345, 0.0
        %vm2410 = vcmp.gt.f32.partialorder %v2346, 0.0
        %vm2411 = vcmp.gt.f32.partialorder %v2347, 0.0
        %vm2412 = vcmp.gt.f32.partialorder %v2348, 0.0
        %vm2413 = vcmp.gt.f32.partialorder %v2349, 0.0
        %vm2414 = vcmp.gt.f32.partialorder %v2350, 0.0
        %vm2415 = vcmp.gt.f32.partialorder %v2351, 0.0
        %vm2416 = vcmp.gt.f32.partialorder %v2352, 0.0
        %vm2417 = vcmp.gt.f32.partialorder %v2353, 0.0
        %vm2418 = vcmp.gt.f32.partialorder %v2354, 0.0
        %vm2419 = vcmp.gt.f32.partialorder %v2355, 0.0
        %vm2420 = vcmp.gt.f32.partialorder %v2356, 0.0
        %vm2421 = vcmp.gt.f32.partialorder %v2357, 0.0
        %vm2422 = vcmp.gt.f32.partialorder %v2358, 0.0
        %vm2423 = vcmp.gt.f32.partialorder %v2359, 0.0
        %vm2424 = vcmp.gt.f32.partialorder %v2360, 0.0
        %vm2425 = vcmp.gt.f32.partialorder %v2361, 0.0
        %vm2426 = vcmp.gt.f32.partialorder %v2362, 0.0
        %vm2427 = vcmp.gt.f32.partialorder %v2363, 0.0
        %vm2428 = vcmp.gt.f32.partialorder %v2364, 0.0
        %vm2429 = vcmp.gt.f32.partialorder %v2365, 0.0
        %vm2430 = vcmp.gt.f32.partialorder %v2366, 0.0
        %vm2431 = vcmp.gt.f32.partialorder %v2367, 0.0
        %vm2432 = vcmp.gt.f32.partialorder %v2368, 0.0
        %vm2433 = vcmp.gt.f32.partialorder %v2369, 0.0
        %vm2434 = vcmp.gt.f32.partialorder %v2370, 0.0
        %vm2435 = vcmp.gt.f32.partialorder %v2371, 0.0
        %vm2436 = vcmp.gt.f32.partialorder %v2372, 0.0
        %vm2437 = vcmp.gt.f32.partialorder %v2373, 0.0
        %vm2438 = vcmp.gt.f32.partialorder %v2374, 0.0
        %vm2439 = vcmp.gt.f32.partialorder %v2375, 0.0
        %vm2440 = vcmp.gt.f32.partialorder %v2376, 0.0
        %vm2441 = vcmp.gt.f32.partialorder %v2377, 0.0
        %vm2442 = vcmp.gt.f32.partialorder %v2378, 0.0
        %vm2443 = vcmp.gt.f32.partialorder %v2379, 0.0
        %vm2444 = vcmp.gt.f32.partialorder %v2380, 0.0
        %vm2445 = vcmp.gt.f32.partialorder %v2381, 0.0
        %vm2446 = vcmp.gt.f32.partialorder %v2382, 0.0
        %vm2447 = vcmp.gt.f32.partialorder %v2383, 0.0
        %vm2448 = vcmp.gt.f32.partialorder %v2384, 0.0
        %vm2449 = vcmp.gt.f32.partialorder %v2385, 0.0
        %vm2450 = vcmp.gt.f32.partialorder %v2386, 0.0
        %vm2451 = vcmp.gt.f32.partialorder %v2387, 0.0
        %vm2452 = vcmp.gt.f32.partialorder %v2388, 0.0
        %vm2453 = vcmp.gt.f32.partialorder %v2389, 0.0
        %vm2454 = vcmp.gt.f32.partialorder %v2390, 0.0
        %vm2455 = vcmp.gt.f32.partialorder %v2391, 0.0
        %vm2456 = vcmp.gt.f32.partialorder %v2392, 0.0
        %vm2457 = vcmp.gt.f32.partialorder %v2393, 0.0
        %vm2458 = vcmp.gt.f32.partialorder %v2394, 0.0
        %vm2459 = vcmp.gt.f32.partialorder %v2395, 0.0
        %vm2460 = vcmp.gt.f32.partialorder %v2396, 0.0
        %vm2461 = vcmp.gt.f32.partialorder %v2397, 0.0
        %vm2462 = vcmp.gt.f32.partialorder %v2398, 0.0
        %vm2463 = vcmp.gt.f32.partialorder %v2399, 0.0
        %vm2464 = vcmp.gt.f32.partialorder %v2400, 0.0
        %vm2465 = vcmp.gt.f32.partialorder %v2401, 0.0
        %vm2466 = vcmp.gt.f32.partialorder %v2402, 0.0
        %vm2467 = vcmp.gt.f32.partialorder %v2403, 0.0
        %vm2468 = vcmp.gt.f32.partialorder %v2404, 0.0
        %vm2469 = vcmp.gt.f32.partialorder %v2405, 0.0
        %vm2470 = vcmp.gt.f32.partialorder %v2406, 0.0
        %v2471 = vmul.f32 %v2343, 0.02
        %v2472 = vmul.f32 %v2344, 0.02
        %v2473 = vmul.f32 %v2345, 0.02
        %v2474 = vmul.f32 %v2346, 0.02
        %v2475 = vmul.f32 %v2347, 0.02
        %v2476 = vmul.f32 %v2348, 0.02
        %v2477 = vmul.f32 %v2349, 0.02
        %v2478 = vmul.f32 %v2350, 0.02
        %v2479 = vmul.f32 %v2351, 0.02
        %v2480 = vmul.f32 %v2352, 0.02
        %v2481 = vmul.f32 %v2353, 0.02
        %v2482 = vmul.f32 %v2354, 0.02
        %v2483 = vmul.f32 %v2355, 0.02
        %v2484 = vmul.f32 %v2356, 0.02
        %v2485 = vmul.f32 %v2357, 0.02
        %v2486 = vmul.f32 %v2358, 0.02
        %v2487 = vmul.f32 %v2359, 0.02
        %v2488 = vmul.f32 %v2360, 0.02
        %v2489 = vmul.f32 %v2361, 0.02
        %v2490 = vmul.f32 %v2362, 0.02
        %v2491 = vmul.f32 %v2363, 0.02
        %v2492 = vmul.f32 %v2364, 0.02
        %v2493 = vmul.f32 %v2365, 0.02
        %v2494 = vmul.f32 %v2366, 0.02
        %v2495 = vmul.f32 %v2367, 0.02
        %v2496 = vmul.f32 %v2368, 0.02
        %v2497 = vmul.f32 %v2369, 0.02
        %v2498 = vmul.f32 %v2370, 0.02
        %v2499 = vmul.f32 %v2371, 0.02
        %v2500 = vmul.f32 %v2372, 0.02
        %v2501 = vmul.f32 %v2373, 0.02
        %v2502 = vmul.f32 %v2374, 0.02
        %v2503 = vmul.f32 %v2375, 0.02
        %v2504 = vmul.f32 %v2376, 0.02
        %v2505 = vmul.f32 %v2377, 0.02
        %v2506 = vmul.f32 %v2378, 0.02
        %v2507 = vmul.f32 %v2379, 0.02
        %v2508 = vmul.f32 %v2380, 0.02
        %v2509 = vmul.f32 %v2381, 0.02
        %v2510 = vmul.f32 %v2382, 0.02
        %v2511 = vmul.f32 %v2383, 0.02
        %v2512 = vmul.f32 %v2384, 0.02
        %v2513 = vmul.f32 %v2385, 0.02
        %v2514 = vmul.f32 %v2386, 0.02
        %v2515 = vmul.f32 %v2387, 0.02
        %v2516 = vmul.f32 %v2388, 0.02
        %v2517 = vmul.f32 %v2389, 0.02
        %v2518 = vmul.f32 %v2390, 0.02
        %v2519 = vmul.f32 %v2391, 0.02
        %v2520 = vmul.f32 %v2392, 0.02
        %v2521 = vmul.f32 %v2393, 0.02
        %v2522 = vmul.f32 %v2394, 0.02
        %v2523 = vmul.f32 %v2395, 0.02
        %v2524 = vmul.f32 %v2396, 0.02
        %v2525 = vmul.f32 %v2397, 0.02
        %v2526 = vmul.f32 %v2398, 0.02
        %v2527 = vmul.f32 %v2399, 0.02
        %v2528 = vmul.f32 %v2400, 0.02
        %v2529 = vmul.f32 %v2401, 0.02
        %v2530 = vmul.f32 %v2402, 0.02
        %v2531 = vmul.f32 %v2403, 0.02
        %v2532 = vmul.f32 %v2404, 0.02
        %v2533 = vmul.f32 %v2405, 0.02
        %v2534 = vmul.f32 %v2406, 0.02
        %v2535 = vsel %vm2407, %v2343, %v2471
        %v2536 = vsel %vm2408, %v2344, %v2472
        %v2537 = vsel %vm2409, %v2345, %v2473
        %v2538 = vsel %vm2410, %v2346, %v2474
        %v2539 = vsel %vm2411, %v2347, %v2475
        %v2540 = vsel %vm2412, %v2348, %v2476
        %v2541 = vsel %vm2413, %v2349, %v2477
        %v2542 = vsel %vm2414, %v2350, %v2478
        %v2543 = vsel %vm2415, %v2351, %v2479
        %v2544 = vsel %vm2416, %v2352, %v2480
        %v2545 = vsel %vm2417, %v2353, %v2481
        %v2546 = vsel %vm2418, %v2354, %v2482
        %v2547 = vsel %vm2419, %v2355, %v2483
        %v2548 = vsel %vm2420, %v2356, %v2484
        %v2549 = vsel %vm2421, %v2357, %v2485
        %v2550 = vsel %vm2422, %v2358, %v2486
        %v2551 = vsel %vm2423, %v2359, %v2487
        %v2552 = vsel %vm2424, %v2360, %v2488
        %v2553 = vsel %vm2425, %v2361, %v2489
        %v2554 = vsel %vm2426, %v2362, %v2490
        %v2555 = vsel %vm2427, %v2363, %v2491
        %v2556 = vsel %vm2428, %v2364, %v2492
        %v2557 = vsel %vm2429, %v2365, %v2493
        %v2558 = vsel %vm2430, %v2366, %v2494
        %v2559 = vsel %vm2431, %v2367, %v2495
        %v2560 = vsel %vm2432, %v2368, %v2496
        %v2561 = vsel %vm2433, %v2369, %v2497
        %v2562 = vsel %vm2434, %v2370, %v2498
        %v2563 = vsel %vm2435, %v2371, %v2499
        %v2564 = vsel %vm2436, %v2372, %v2500
        %v2565 = vsel %vm2437, %v2373, %v2501
        %v2566 = vsel %vm2438, %v2374, %v2502
        %v2567 = vsel %vm2439, %v2375, %v2503
        %v2568 = vsel %vm2440, %v2376, %v2504
        %v2569 = vsel %vm2441, %v2377, %v2505
        %v2570 = vsel %vm2442, %v2378, %v2506
        %v2571 = vsel %vm2443, %v2379, %v2507
        %v2572 = vsel %vm2444, %v2380, %v2508
        %v2573 = vsel %vm2445, %v2381, %v2509
        %v2574 = vsel %vm2446, %v2382, %v2510
        %v2575 = vsel %vm2447, %v2383, %v2511
        %v2576 = vsel %vm2448, %v2384, %v2512
        %v2577 = vsel %vm2449, %v2385, %v2513
        %v2578 = vsel %vm2450, %v2386, %v2514
        %v2579 = vsel %vm2451, %v2387, %v2515
        %v2580 = vsel %vm2452, %v2388, %v2516
        %v2581 = vsel %vm2453, %v2389, %v2517
        %v2582 = vsel %vm2454, %v2390, %v2518
        %v2583 = vsel %vm2455, %v2391, %v2519
        %v2584 = vsel %vm2456, %v2392, %v2520
        %v2585 = vsel %vm2457, %v2393, %v2521
        %v2586 = vsel %vm2458, %v2394, %v2522
        %v2587 = vsel %vm2459, %v2395, %v2523
        %v2588 = vsel %vm2460, %v2396, %v2524
        %v2589 = vsel %vm2461, %v2397, %v2525
        %v2590 = vsel %vm2462, %v2398, %v2526
        %v2591 = vsel %vm2463, %v2399, %v2527
        %v2592 = vsel %vm2464, %v2400, %v2528
        %v2593 = vsel %vm2465, %v2401, %v2529
        %v2594 = vsel %vm2466, %v2402, %v2530
        %v2595 = vsel %vm2467, %v2403, %v2531
        %v2596 = vsel %vm2468, %v2404, %v2532
        %v2597 = vsel %vm2469, %v2405, %v2533
        %v2598 = vsel %vm2470, %v2406, %v2534
        %2599 = vmatprep.subr.mxu0 %v2536
        %2600 = vmatpush1.xpose.msra.mxu0 %v2535
        %2601 = vmatprep.subr.mxu0 %v2538
        %2602 = vmatpush1.xpose.msra.mxu0 %v2537
        %2603 = vmatprep.subr.mxu0 %v2540
        %2604 = vmatpush1.xpose.msra.mxu0 %v2539
        %2605 = vmatprep.subr.mxu0 %v2542
        %2606 = vmatpush1.xpose.msra.mxu0 %v2541
        %2607 = vmatprep.subr.mxu0 %v2544
        %2608 = vmatpush1.xpose.msra.mxu0 %v2543
        %2609 = vmatprep.subr.mxu0 %v2546
        %2610 = vmatpush1.xpose.msra.mxu0 %v2545
        %2611 = vmatprep.subr.mxu0 %v2548
        %2612 = vmatpush1.xpose.msra.mxu0 %v2547
        %2613 = vmatprep.subr.mxu0 %v2550
        %2614 = vmatpush1.xpose.msra.mxu0 %v2549
        %2615 = vmatprep.subr.mxu0 %v2552
        %2616 = vmatpush1.xpose.msra.mxu0 %v2551
        %2617 = vmatprep.subr.mxu0 %v2554
        %2618 = vmatpush1.xpose.msra.mxu0 %v2553
        %2619 = vmatprep.subr.mxu0 %v2556
        %2620 = vmatpush1.xpose.msra.mxu0 %v2555
        %2621 = vmatprep.subr.mxu0 %v2558
        %2622 = vmatpush1.xpose.msra.mxu0 %v2557
        %2623 = vmatprep.subr.mxu0 %v2560
        %2624 = vmatpush1.xpose.msra.mxu0 %v2559
        %2625 = vmatprep.subr.mxu0 %v2562
        %2626 = vmatpush1.xpose.msra.mxu0 %v2561
        %2627 = vmatprep.subr.mxu0 %v2564
        %2628 = vmatpush1.xpose.msra.mxu0 %v2563
        %2629 = vmatprep.subr.mxu0 %v2566
        %2630 = vmatpush1.xpose.msra.mxu0 %v2565
        %2631 = vmatprep.subr.mxu0 %v2568
        %2632 = vmatpush1.xpose.msra.mxu0 %v2567
        %2633 = vmatprep.subr.mxu0 %v2570
        %2634 = vmatpush1.xpose.msra.mxu0 %v2569
        %2635 = vmatprep.subr.mxu0 %v2572
        %2636 = vmatpush1.xpose.msra.mxu0 %v2571
        %2637 = vmatprep.subr.mxu0 %v2574
        %2638 = vmatpush1.xpose.msra.mxu0 %v2573
        %2639 = vmatprep.subr.mxu0 %v2576
        %2640 = vmatpush1.xpose.msra.mxu0 %v2575
        %2641 = vmatprep.subr.mxu0 %v2578
        %2642 = vmatpush1.xpose.msra.mxu0 %v2577
        %2643 = vmatprep.subr.mxu0 %v2580
        %2644 = vmatpush1.xpose.msra.mxu0 %v2579
        %2645 = vmatprep.subr.mxu0 %v2582
        %2646 = vmatpush1.xpose.msra.mxu0 %v2581
        %2647 = vmatprep.subr.mxu0 %v2584
        %2648 = vmatpush1.xpose.msra.mxu0 %v2583
        %2649 = vmatprep.subr.mxu0 %v2586
        %2650 = vmatpush1.xpose.msra.mxu0 %v2585
        %2651 = vmatprep.subr.mxu0 %v2588
        %2652 = vmatpush1.xpose.msra.mxu0 %v2587
        %2653 = vmatprep.subr.mxu0 %v2590
        %2654 = vmatpush1.xpose.msra.mxu0 %v2589
        %2655 = vmatprep.subr.mxu0 %v2592
        %2656 = vmatpush1.xpose.msra.mxu0 %v2591
        %2657 = vmatprep.subr.mxu0 %v2594
        %2658 = vmatpush1.xpose.msra.mxu0 %v2593
        %2659 = vmatprep.subr.mxu0 %v2596
        %2660 = vmatpush1.xpose.msra.mxu0 %v2595
        %2661 = vmatprep.subr.mxu0 %v2598
        %2662 = vmatpush1.xpose.msra.mxu0 %v2597
        %2663 = vmatprep.mubr.f32.mxu0 %v282
        %2664 = vmatmul.mubr.f32.gmra.mrb[0].mxu0 %v281
        %v2665 = vpop.f32.mrb[0].mxu0
        %v2666 = vadd.f32 0.0, %v2665
        %v2667 = vpop.f32.mrb[0].mxu0
        %v2668 = vadd.f32 0.0, %v2667
        %2669 = vdwg.mxu0
        %v2670 = vmul.f32 %v2535, %v2535
        %v2671 = vmul.f32 %v2536, %v2536
        %v2672 = vmul.f32 %v2537, %v2537
        %v2673 = vmul.f32 %v2538, %v2538
        %v2674 = vmul.f32 %v2539, %v2539
        %v2675 = vmul.f32 %v2540, %v2540
        %v2676 = vmul.f32 %v2541, %v2541
        %v2677 = vmul.f32 %v2542, %v2542
        %v2678 = vmul.f32 %v2543, %v2543
        %v2679 = vmul.f32 %v2544, %v2544
        %v2680 = vmul.f32 %v2545, %v2545
        %v2681 = vmul.f32 %v2546, %v2546
        %v2682 = vmul.f32 %v2547, %v2547
        %v2683 = vmul.f32 %v2548, %v2548
        %v2684 = vmul.f32 %v2549, %v2549
        %v2685 = vmul.f32 %v2550, %v2550
        %v2686 = vmul.f32 %v2551, %v2551
        %v2687 = vmul.f32 %v2552, %v2552
        %v2688 = vmul.f32 %v2553, %v2553
        %v2689 = vmul.f32 %v2554, %v2554
        %v2690 = vmul.f32 %v2555, %v2555
        %v2691 = vmul.f32 %v2556, %v2556
        %v2692 = vmul.f32 %v2557, %v2557
        %v2693 = vmul.f32 %v2558, %v2558
        %v2694 = vmul.f32 %v2559, %v2559
        %v2695 = vmul.f32 %v2560, %v2560
        %v2696 = vmul.f32 %v2561, %v2561
        %v2697 = vmul.f32 %v2562, %v2562
        %v2698 = vmul.f32 %v2563, %v2563
        %v2699 = vmul.f32 %v2564, %v2564
        %v2700 = vmul.f32 %v2565, %v2565
        %v2701 = vmul.f32 %v2566, %v2566
        %v2702 = vmul.f32 %v2567, %v2567
        %v2703 = vmul.f32 %v2568, %v2568
        %v2704 = vmul.f32 %v2569, %v2569
        %v2705 = vmul.f32 %v2570, %v2570
        %v2706 = vmul.f32 %v2571, %v2571
        %v2707 = vmul.f32 %v2572, %v2572
        %v2708 = vmul.f32 %v2573, %v2573
        %v2709 = vmul.f32 %v2574, %v2574
        %v2710 = vmul.f32 %v2575, %v2575
        %v2711 = vmul.f32 %v2576, %v2576
        %v2712 = vmul.f32 %v2577, %v2577
        %v2713 = vmul.f32 %v2578, %v2578
        %v2714 = vmul.f32 %v2579, %v2579
        %v2715 = vmul.f32 %v2580, %v2580
        %v2716 = vmul.f32 %v2581, %v2581
        %v2717 = vmul.f32 %v2582, %v2582
        %v2718 = vmul.f32 %v2583, %v2583
        %v2719 = vmul.f32 %v2584, %v2584
        %v2720 = vmul.f32 %v2585, %v2585
        %v2721 = vmul.f32 %v2586, %v2586
        %v2722 = vmul.f32 %v2587, %v2587
        %v2723 = vmul.f32 %v2588, %v2588
        %v2724 = vmul.f32 %v2589, %v2589
        %v2725 = vmul.f32 %v2590, %v2590
        %v2726 = vmul.f32 %v2591, %v2591
        %v2727 = vmul.f32 %v2592, %v2592
        %v2728 = vmul.f32 %v2593, %v2593
        %v2729 = vmul.f32 %v2594, %v2594
        %v2730 = vmul.f32 %v2595, %v2595
        %v2731 = vmul.f32 %v2596, %v2596
        %v2732 = vmul.f32 %v2597, %v2597
        %v2733 = vmul.f32 %v2598, %v2598
        %2734 = vmatprep.subr.mxu0 %v2671
        %2735 = vmatpush1.xpose.msra.mxu0 %v2670
        %2736 = vmatprep.subr.mxu0 %v2673
        %2737 = vmatpush1.xpose.msra.mxu0 %v2672
        %2738 = vmatprep.subr.mxu0 %v2675
        %2739 = vmatpush1.xpose.msra.mxu0 %v2674
        %2740 = vmatprep.subr.mxu0 %v2677
        %2741 = vmatpush1.xpose.msra.mxu0 %v2676
        %2742 = vmatprep.subr.mxu0 %v2679
        %2743 = vmatpush1.xpose.msra.mxu0 %v2678
        %2744 = vmatprep.subr.mxu0 %v2681
        %2745 = vmatpush1.xpose.msra.mxu0 %v2680
        %2746 = vmatprep.subr.mxu0 %v2683
        %2747 = vmatpush1.xpose.msra.mxu0 %v2682
        %2748 = vmatprep.subr.mxu0 %v2685
        %2749 = vmatpush1.xpose.msra.mxu0 %v2684
        %2750 = vmatprep.subr.mxu0 %v2687
        %2751 = vmatpush1.xpose.msra.mxu0 %v2686
        %2752 = vmatprep.subr.mxu0 %v2689
        %2753 = vmatpush1.xpose.msra.mxu0 %v2688
        %2754 = vmatprep.subr.mxu0 %v2691
        %2755 = vmatpush1.xpose.msra.mxu0 %v2690
        %2756 = vmatprep.subr.mxu0 %v2693
        %2757 = vmatpush1.xpose.msra.mxu0 %v2692
        %2758 = vmatprep.subr.mxu0 %v2695
        %2759 = vmatpush1.xpose.msra.mxu0 %v2694
        %2760 = vmatprep.subr.mxu0 %v2697
        %2761 = vmatpush1.xpose.msra.mxu0 %v2696
        %2762 = vmatprep.subr.mxu0 %v2699
        %2763 = vmatpush1.xpose.msra.mxu0 %v2698
        %2764 = vmatprep.subr.mxu0 %v2701
        %2765 = vmatpush1.xpose.msra.mxu0 %v2700
        %2766 = vmatprep.subr.mxu0 %v2703
        %2767 = vmatpush1.xpose.msra.mxu0 %v2702
        %2768 = vmatprep.subr.mxu0 %v2705
        %2769 = vmatpush1.xpose.msra.mxu0 %v2704
        %2770 = vmatprep.subr.mxu0 %v2707
        %2771 = vmatpush1.xpose.msra.mxu0 %v2706
        %2772 = vmatprep.subr.mxu0 %v2709
        %2773 = vmatpush1.xpose.msra.mxu0 %v2708
        %2774 = vmatprep.subr.mxu0 %v2711
        %2775 = vmatpush1.xpose.msra.mxu0 %v2710
        %2776 = vmatprep.subr.mxu0 %v2713
        %2777 = vmatpush1.xpose.msra.mxu0 %v2712
        %2778 = vmatprep.subr.mxu0 %v2715
        %2779 = vmatpush1.xpose.msra.mxu0 %v2714
        %2780 = vmatprep.subr.mxu0 %v2717
        %2781 = vmatpush1.xpose.msra.mxu0 %v2716
        %2782 = vmatprep.subr.mxu0 %v2719
        %2783 = vmatpush1.xpose.msra.mxu0 %v2718
        %2784 = vmatprep.subr.mxu0 %v2721
        %2785 = vmatpush1.xpose.msra.mxu0 %v2720
        %2786 = vmatprep.subr.mxu0 %v2723
        %2787 = vmatpush1.xpose.msra.mxu0 %v2722
        %2788 = vmatprep.subr.mxu0 %v2725
        %2789 = vmatpush1.xpose.msra.mxu0 %v2724
        %2790 = vmatprep.subr.mxu0 %v2727
        %2791 = vmatpush1.xpose.msra.mxu0 %v2726
        %2792 = vmatprep.subr.mxu0 %v2729
        %2793 = vmatpush1.xpose.msra.mxu0 %v2728
        %2794 = vmatprep.subr.mxu0 %v2731
        %2795 = vmatpush1.xpose.msra.mxu0 %v2730
        %2796 = vmatprep.subr.mxu0 %v2733
        %2797 = vmatpush1.xpose.msra.mxu0 %v2732
        %2798 = vmatprep.mubr.f32.mxu0 %v282
        %2799 = vmatmul.mubr.f32.gmra.mrb[0].mxu0 %v281
        %v2800 = vpop.f32.mrb[0].mxu0
        %v2801 = vadd.f32 0.0, %v2800
        %v2802 = vpop.f32.mrb[0].mxu0
        %v2803 = vadd.f32 0.0, %v2802
        %2804 = vdwg.mxu0
        %v2805 = vmul.f32 %v2666, %v2666
        %v2806 = vmul.f32 %v2668, %v2668
        %v2807 = vsub.f32 %v2801, %v2805
        %v2808 = vsub.f32 %v2803, %v2806
        %v2809 = vadd.f32 %v2807, 1e-05
        %v2810 = vadd.f32 %v2808, 1e-05
        %v2811 = vrsqrt.pop %v2809
        %v2812 = vrsqrt.pop %v2810
        %v2815 = vrot.slane %v2666, 2
        %v2816 = vrot.slane %v2668, 2
        %v2819 = vsub.f32 %v2666, %v2815
        %v2820 = vsub.f32 %v2668, %v2816
        %v2823 = vrot.slane %v2819, 7
        %v2824 = vrot.slane %v2820, 7
        %v2827 = vmul.f32 %v2811, %v2823
        %v2828 = vmul.f32 %v2812, %v2824
        %v2829 = vld [vmem:[#allocation2] sm:$0x1]
        %2831 = vset.pattern.permute.xlu0 0
        %2832 = vperm.xlu0 %2831, %v2829
        %v2833 = vpop.permute.xlu0 %2832
        %v2835 = vlaneseq
        %v2836 = vshrl.u32 %v2835, 7
        %v2837 = vsub.s32 0, %v2836
        %v2838 = vrot.slane %v2833, %v2837
        %v2839 = vadd.f32 %v2827, %v2838
        %v2840 = vadd.f32 %v2828, %v2838
        %v2841 = vsub.f32 0.0, %v2839
        %v2842 = vsub.f32 0.0, %v2840
        %v2843 = vmul.f32 %v2841, 1.442695
        %v2844 = vpow.pop %v2843
        %v2845 = vmul.f32 %v2842, 1.442695
        %v2846 = vpow.pop %v2845
        %v2847 = vadd.f32 %v2844, 1.0
        %v2848 = vadd.f32 %v2846, 1.0
        %v2849 = vrcp.pop %v2847
        %v2850 = vmul.f32 1.0, %v2849
        %v2851 = vrcp.pop %v2848
        %v2852 = vmul.f32 1.0, %v2851
        %v2855 = vcombine.low %v2850, %v2852
        %v2857 = vunpack.c.l.s4 1966171168
        %v2858 = vunpack.c.0.s8 %v2857
        %v2859 = vlaneseq
        %v2860 = vshrl.u32 %v2859, 7
        %v2861 = vsub.s32 %v2858, %v2860
        %v2862 = vrot.slane %v2855, %v2861
        %v2864 = vunpack.c.l.s4 1966171168
        %v2865 = vunpack.c.0.s8 %v2864
        %v2866 = vlaneseq
        %v2867 = vshrl.u32 %v2866, 7
        %v2868 = vsub.s32 %v2865, %v2867
        %v2869 = vrot.slane %v2862, %v2868
        %v2870 = vcombine.high %v2869, %v2869
        %v2872 = vlaneseq
        %vm2873 = vcmp.ge.s32.totalorder %v2872, 0
        %vm2874 = vcmp.lt.s32.totalorder %v2872, 256
        %vm2875 = vmand %vm2873, %vm2874
        %2876 = vst.msk [vmem:[%s265] sm:$0x3] %vm2875, %v2870
        %s2877 = sand.u32 %s166, 1
        %s2878 = scalar_lea.sflag [#allocation4], %s2877
        %s2879 = sand.u32 %s166, 1
        %s2880 = smul.addr %s2879, 2
        %s2881 = scalar_lea.vmem [#allocation3], %s2880
        // Predicated region
        $region45: #{discriminator_forward_batch.1} parent=43 // pred_check
          %p2882 = pneg %p176
        $region46: #{discriminator_forward_batch.1} parent=43 // pred_check_branch
          %2884 = sbr.rel (%p2882) target = $region48
        $region47: #{discriminator_forward_batch.1} parent=43 // pred_region
          %s2885 = smul.u32 2, %s22
          %s2887 = ssub.s32 32, 32
          %2888 = vsyncadd %s2878, %s2887
          %s2889 = smul.addr %s2885, 16
          %s2890 = scalar_lea.hbm %s6, %s2889
          %s2892 = sshll.u32 %s2881, 4
          %s2893 = int_to_ptr.vmem [resolvable:$true] %s2892
          %2895 = dma.vmem_to_hbm [thread:$0]  %s2893, 32, %s2890, %s2878
        $region48: #{discriminator_forward_batch.1} parent=43 // pred_fallthru
          _
      $region44: #{discriminator_forward_batch.1} parent=5 // pred_fallthru
        _
      %p2896 = scmp.le.s32.totalorder 2, %s17
      // Predicated region
      $region49: #{discriminator_forward_batch.1} parent=5 // pred_check
        %p2897 = pneg %p2896
      $region50: #{discriminator_forward_batch.1} parent=5 // pred_check_branch
        %2899 = sbr.rel (%p2897) target = $region52
      $region51: #{discriminator_forward_batch.1} parent=5 // pred_region
        %s2900 = ssub.s32 %s17, 2
        // Predicated region
        $region53: #{discriminator_forward_batch.1} parent=51 // pred_check
          %p2901 = pneg %p182
        $region54: #{discriminator_forward_batch.1} parent=51 // pred_check_branch
          %2903 = sbr.rel (%p2901) target = $region56
        $region55: #{discriminator_forward_batch.1} parent=51 // pred_region
          %s2904 = sand.u32 %s167, 1
          %s2905 = scalar_lea.sflag [#allocation4], %s2904
          %s2906 = sand.u32 %s167, 1
          %s2907 = smul.addr %s2906, 2
          %s2908 = scalar_lea.vmem [#allocation3], %s2907
          %2909 = dma.done %s2905, 32
        $region56: #{discriminator_forward_batch.1} parent=51 // pred_fallthru
          _
      $region52: #{discriminator_forward_batch.1} parent=5 // pred_fallthru
        _
    $region6: #{discriminator_forward_batch.1} parent=1 // loop_footer
      %s21 = sadd.s32 1, %s17
    $region7: #{discriminator_forward_batch.1} parent=1 // loop_footer_branch
      %16 = sbr.rel target = $region3
    $region8: #{discriminator_forward_batch.1} parent=1 // loop_exit
      _
    %2910 = vsyncpa [#allocation4], 1
    %s2911 = scalar_lea.sflag [#allocation4], 1
    %2912 = vsyncpa %s2911, 1

</llo_original>
